<compile_context>
chip_gen: v7x
topology: tpu7x:2x2x1
jax: 0.10.0
libtpu: 0.0.40
codegen_flags: <defaults>
</compile_context>

<pallas_src>
from functools import partial

import jax
import jax.numpy as jnp
from jax.experimental import pallas as pl
from jax.experimental.pallas import tpu as pltpu

NUM_HEADS = 8


def _head_masks(hidden, num_heads, dtype):
    """Head-indicator matrices built in-kernel (iota + compare, no HBM input)."""
    head_dim = hidden // num_heads
    c = jax.lax.broadcasted_iota(jnp.int32, (hidden, num_heads), 0)
    h = jax.lax.broadcasted_iota(jnp.int32, (hidden, num_heads), 1)
    hmask = ((c >= h * head_dim) & (c < (h + 1) * head_dim)).astype(dtype)      # (H, nh)
    ct = jax.lax.broadcasted_iota(jnp.int32, (num_heads, hidden), 1)
    ht = jax.lax.broadcasted_iota(jnp.int32, (num_heads, hidden), 0)
    hmask_t = ((ct >= ht * head_dim) & (ct < (ht + 1) * head_dim)).astype(dtype)  # (nh, H)
    return hmask, hmask_t


def _cross_attn_labse_kernel(cls1_ref, cls2_ref, o1_ref, o2_ref,
                             wq_ref, bq_ref, wkv_ref, bkv_ref,
                             wo_ref, bo_ref, wc_ref, bc_ref,
                             logits_ref, attn_buf,
                             *, num_heads, tb, s1, s2):
    f32 = jnp.float32
    H = cls1_ref.shape[-1]
    hmask, hmask_t = _head_masks(H, num_heads, f32)

    cls1 = cls1_ref[0]                      # (tb, H)     f32 (feeds |diff| + classifier)
    cls2 = cls2_ref[0]                      # (tb, H)     f32
    o1 = o1_ref[0]                          # (tb*s1, H)  bf16
    o2 = o2_ref[0]                          # (tb*s2, H)  bf16

    wq = wq_ref[...]                        # (H, H)  bf16, 1/sqrt(head_dim) folded in
    wkv = wkv_ref[...]                      # (H, 2H) bf16, fused K|V
    wo = wo_ref[...]                        # (H, H)  bf16
    bq, bkv, bo = bq_ref[...], bkv_ref[...], bo_ref[...]   # f32 biases

    # --- projections: bf16 MXU inputs, f32 accumulation ---------------------
    q1 = jnp.dot(cls1.astype(jnp.bfloat16), wq, preferred_element_type=f32) + bq  # (tb, H)
    q2 = jnp.dot(cls2.astype(jnp.bfloat16), wq, preferred_element_type=f32) + bq  # (tb, H)
    kv1 = jnp.dot(o1, wkv, preferred_element_type=f32) + bkv                      # (tb*s1, 2H)
    kv2 = jnp.dot(o2, wkv, preferred_element_type=f32) + bkv                      # (tb*s2, 2H)
    k1, v1 = kv1[:, 0:H], kv1[:, H:2 * H]
    k2, v2 = kv2[:, 0:H], kv2[:, H:2 * H]

    ones1 = jnp.ones((1, s1), f32)          # hoisted out of the per-row loop
    ones2 = jnp.ones((1, s2), f32)

    def attend(q_row, k_all, v_all, s, ones_row, t):
        # single-query MHA for batch row t over its s keys/values (f32 math).
        k = k_all[t * s:(t + 1) * s, :]
        v = v_all[t * s:(t + 1) * s, :]
        # per-head score reduction via head-indicator matmul (no reshapes)
        scores = jnp.dot(q_row * k, hmask, preferred_element_type=f32)     # (s, nh)
        m = jnp.max(scores, axis=0, keepdims=True)
        e = jnp.exp(scores - m)                                            # (s, nh)
        denom = jnp.sum(e, axis=0, keepdims=True)                          # (1, nh)
        e_full = jnp.dot(e, hmask_t, preferred_element_type=f32)           # (s, H)
        # weighted value sum as a (1,s)@(s,H) MXU pass instead of a sublane reduce
        attn_un = jnp.dot(ones_row, e_full * v, preferred_element_type=f32)  # (1, H)
        # deferred softmax normalization: EUP reciprocal, broadcast back per head
        recip = pl.reciprocal(denom, approx=True)                          # (1, nh)
        recip_full = jnp.dot(recip, hmask_t, preferred_element_type=f32)   # (1, H)
        return attn_un * recip_full                                        # (1, H)

    for t in range(tb):                     # static unroll; tb is a small Python int
        a12 = attend(q1[t:t + 1, :], k2, v2, s2, ones2, t)   # cls1 attends over out2
        a21 = attend(q2[t:t + 1, :], k1, v1, s1, ones1, t)   # cls2 attends over out1
        attn_buf[pl.ds(t, 1), :] = a12.astype(attn_buf.dtype)
        attn_buf[pl.ds(tb + t, 1), :] = a21.astype(attn_buf.dtype)

    # one batched out-projection for both directions: (2*tb, H) @ (H, H)
    crossed = jnp.dot(attn_buf[...], wo, preferred_element_type=f32) + bo
    cross12 = crossed[0:tb, :]
    cross21 = crossed[tb:2 * tb, :]
    diff = jnp.abs(cls1 - cls2)

    # classifier over concat([cls1, cls2, diff, cross12, cross21]) as 5 sliced
    # matmuls (avoids an in-kernel concatenate); f32 path.
    wc = wc_ref[...]                        # (5H, 2) f32
    logits = (jnp.dot(cls1,    wc[0 * H:1 * H], preferred_element_type=f32) +
              jnp.dot(cls2,    wc[1 * H:2 * H], preferred_element_type=f32) +
              jnp.dot(diff,    wc[2 * H:3 * H], preferred_element_type=f32) +
              jnp.dot(cross12, wc[3 * H:4 * H], preferred_element_type=f32) +
              jnp.dot(cross21, wc[4 * H:5 * H], preferred_element_type=f32) +
              bc_ref[...])
    logits_ref[0] = logits                  # (tb, 2)


def cross_attn_labse(out1, out2, params, num_heads=NUM_HEADS, max_batch_tile=8):
    """out1/out2: (B, S, H) BERT last_hidden_state tensors (f32)."""
    B, S1, H = out1.shape
    _, S2, _ = out2.shape
    head_dim = H // num_heads
    scale = 1.0 / (head_dim ** 0.5)

    # batch rows per grid step (amortizes per-step overhead, reuses resident
    # weights, improves MXU M-dim fill).
    # TODO(synk): at LaBSE scale (H=768, S up to 512) cap tb so the two
    #             double-buffered bf16 sequence blocks fit the VMEM budget.
    tb = max(1, min(B, max_batch_tile))
    while B % tb:
        tb -= 1
    G = B // tb

    f32, bf16 = jnp.float32, jnp.bfloat16
    ipw = params['in_proj_weight'].astype(f32)
    ipb = params['in_proj_bias'].astype(f32)
    wq_t = (ipw[0:H].T * scale).astype(bf16)                                   # (H, H), scale folded
    bq = (ipb[0:H] * scale)[None, :]                                           # (1, H) f32
    wkv_t = jnp.concatenate([ipw[H:2 * H].T, ipw[2 * H:3 * H].T], 1).astype(bf16)  # (H, 2H)
    bkv = jnp.concatenate([ipb[H:2 * H], ipb[2 * H:3 * H]])[None, :]           # (1, 2H) f32
    wo_t = params['out_proj_weight'].astype(f32).T.astype(bf16)                # (H, H)
    bo = params['out_proj_bias'].astype(f32)[None, :]                          # (1, H)
    wc_t = params['classifier_weight'].astype(f32).T                           # (5H, 2)
    bc = params['classifier_bias'].astype(f32)[None, :]                        # (1, 2)

    # CLS tokens stay f32 (|diff| + classifier path); full sequences go bf16.
    # Wrapper-side reshape to (G, tb*, ...) keeps every block's last two dims
    # equal to the full array dims => always layout-legal for any tb.
    cls1 = out1[:, 0, :].astype(f32).reshape(G, tb, H)
    cls2 = out2[:, 0, :].astype(f32).reshape(G, tb, H)
    o1 = out1.astype(bf16).reshape(G, tb * S1, H)
    o2 = out2.astype(bf16).reshape(G, tb * S2, H)

    def blk(shape):
        return pl.BlockSpec(shape, lambda g: (g,) + (0,) * (len(shape) - 1))

    def full(shape):
        return pl.BlockSpec(shape, lambda g: (0,) * len(shape))

    grid_spec = pltpu.PrefetchScalarGridSpec(
        num_scalar_prefetch=0,
        grid=(G,),
        in_specs=[
            blk((1, tb, H)),                      # cls1
            blk((1, tb, H)),                      # cls2
            blk((1, tb * S1, H)),                 # out1 (flattened per batch tile)
            blk((1, tb * S2, H)),                 # out2
            full((H, H)), full((1, H)),           # Wq (scaled), bq (scaled)
            full((H, 2 * H)), full((1, 2 * H)),   # fused Wk|Wv, bk|bv
            full((H, H)), full((1, H)),           # Wout, bout
            full((5 * H, 2)), full((1, 2)),       # classifier W, b
        ],
        out_specs=blk((1, tb, 2)),
        scratch_shapes=[pltpu.VMEM((2 * tb, H), jnp.bfloat16)],
    )

    kernel = partial(_cross_attn_labse_kernel,
                     num_heads=num_heads, tb=tb, s1=S1, s2=S2)
    out = pl.pallas_call(
        kernel,
        out_shape=jax.ShapeDtypeStruct((G, tb, 2), jnp.float32),
        grid_spec=grid_spec,
        compiler_params=pltpu.CompilerParams(
            dimension_semantics=("parallel",),        # independent batch tiles (2 TCs on v7x)
            vmem_limit_bytes=64 * 1024 * 1024),       # headroom: weights are grid-invariant
    )(cls1, cls2, o1, o2, wq_t, bq, wkv_t, bkv, wo_t, bo, wc_t, bc)
    return out.reshape(B, 2)


def reference(out1, out2, params, num_heads=NUM_HEADS):
    """Pure-JAX f32 reference matching torch.nn.MultiheadAttention (eval mode)."""
    hp = jax.lax.Precision.HIGHEST
    H = out1.shape[-1]
    hd = H // num_heads
    ipw, ipb = params['in_proj_weight'], params['in_proj_bias']
    cls1, cls2 = out1[:, 0, :], out2[:, 0, :]

    def mha(q_in, kv):
        q = jnp.dot(q_in, ipw[:H].T, precision=hp) + ipb[:H]
        k = jnp.dot(kv, ipw[H:2 * H].T, precision=hp) + ipb[H:2 * H]
        v = jnp.dot(kv, ipw[2 * H:].T, precision=hp) + ipb[2 * H:]
        B, S, _ = kv.shape
        qh = q.reshape(B, num_heads, hd)
        kh = k.reshape(B, S, num_heads, hd)
        vh = v.reshape(B, S, num_heads, hd)
        scores = jnp.einsum('bhd,bshd->bhs', qh, kh, precision=hp) / (hd ** 0.5)
        p = jax.nn.softmax(scores, axis=-1)
        o = jnp.einsum('bhs,bshd->bhd', p, vh, precision=hp).reshape(B, H)
        return jnp.dot(o, params['out_proj_weight'].T, precision=hp) + params['out_proj_bias']

    cross12 = mha(cls1, out2)
    cross21 = mha(cls2, out1)
    diff = jnp.abs(cls1 - cls2)
    fused = jnp.concatenate([cls1, cls2, diff, cross12, cross21], axis=1)
    return jnp.dot(fused, params['classifier_weight'].T, precision=hp) + params['classifier_bias']


if __name__ == "__main__":
    B, S1, S2, H = 2, 8, 12, 32   # small stand-in for LaBSE hidden=768
    key = jax.random.PRNGKey(0)
    keys = jax.random.split(key, 8)

    out1 = jax.random.normal(keys[0], (B, S1, H), jnp.float32)   # bert(enc1).last_hidden_state
    out2 = jax.random.normal(keys[1], (B, S2, H), jnp.float32)   # bert(enc2).last_hidden_state

    params = {
        'in_proj_weight':    0.1 * jax.random.normal(keys[2], (3 * H, H), jnp.float32),
        'in_proj_bias':      0.1 * jax.random.normal(keys[3], (3 * H,),   jnp.float32),
        'out_proj_weight':   0.1 * jax.random.normal(keys[4], (H, H),     jnp.float32),
        'out_proj_bias':     0.1 * jax.random.normal(keys[5], (H,),       jnp.float32),
        'classifier_weight': 0.1 * jax.random.normal(keys[6], (2, 5 * H), jnp.float32),
        'classifier_bias':   0.1 * jax.random.normal(keys[7], (2,),       jnp.float32),
    }

    logits = cross_attn_labse(out1, out2, params)
    jax.block_until_ready(logits)

    ref = reference(out1, out2, params)
    assert logits.shape == (B, 2)
    # bf16 MXU inputs + approx reciprocal => compare against the f32 reference
    # at a bf16-appropriate tolerance.
    assert jnp.allclose(logits, ref, atol=5e-2, rtol=5e-2), (logits, ref)
    print("KERNEL_OK")
</pallas_src>

<mosaic_0001>
module attributes {stable_mosaic.version = 11 : i64} {
  func.func @_cross_attn_labse_kernel(%arg0: i32, %arg1: memref<1x2x32xf32, #tpu.memory_space<vmem>>, %arg2: memref<1x2x32xf32, #tpu.memory_space<vmem>>, %arg3: memref<1x16x32xbf16, #tpu.memory_space<vmem>>, %arg4: memref<1x24x32xbf16, #tpu.memory_space<vmem>>, %arg5: memref<32x32xbf16, #tpu.memory_space<vmem>>, %arg6: memref<1x32xf32, #tpu.memory_space<vmem>>, %arg7: memref<32x64xbf16, #tpu.memory_space<vmem>>, %arg8: memref<1x64xf32, #tpu.memory_space<vmem>>, %arg9: memref<32x32xbf16, #tpu.memory_space<vmem>>, %arg10: memref<1x32xf32, #tpu.memory_space<vmem>>, %arg11: memref<160x2xf32, #tpu.memory_space<vmem>>, %arg12: memref<1x2xf32, #tpu.memory_space<vmem>>, %arg13: memref<1x2x2xf32, #tpu.memory_space<vmem>>, %arg14: memref<4x32xbf16, #tpu.memory_space<vmem>>) attributes {dimension_semantics = [#tpu.dimension_semantics<parallel>], iteration_bounds = array<i64: 1>, scalar_prefetch = 0 : i64, scratch_operands = 1 : i64, tpu.core_type = #tpu.core_type<tc>, window_params = [{transform_indices = @transform_0, window_bounds = array<i64: 1, 2, 32>}, {transform_indices = @transform_1, window_bounds = array<i64: 1, 2, 32>}, {transform_indices = @transform_2, window_bounds = array<i64: 1, 16, 32>}, {transform_indices = @transform_3, window_bounds = array<i64: 1, 24, 32>}, {pipeline_mode = #tpu.pipeline_mode<synchronous>, transform_indices = @transform_4, window_bounds = array<i64: 32, 32>}, {pipeline_mode = #tpu.pipeline_mode<synchronous>, transform_indices = @transform_5, window_bounds = array<i64: 1, 32>}, {pipeline_mode = #tpu.pipeline_mode<synchronous>, transform_indices = @transform_6, window_bounds = array<i64: 32, 64>}, {pipeline_mode = #tpu.pipeline_mode<synchronous>, transform_indices = @transform_7, window_bounds = array<i64: 1, 64>}, {pipeline_mode = #tpu.pipeline_mode<synchronous>, transform_indices = @transform_8, window_bounds = array<i64: 32, 32>}, {pipeline_mode = #tpu.pipeline_mode<synchronous>, transform_indices = @transform_9, window_bounds = array<i64: 1, 32>}, {pipeline_mode = #tpu.pipeline_mode<synchronous>, transform_indices = @transform_10, window_bounds = array<i64: 160, 2>}, {pipeline_mode = #tpu.pipeline_mode<synchronous>, transform_indices = @transform_11, window_bounds = array<i64: 1, 2>}, {transform_indices = @transform_12, window_bounds = array<i64: 1, 2, 2>}]} {
    %0 = tpu.iota {dimensions = array<i32: 0>} : vector<32x8xi32>
    %1 = tpu.iota {dimensions = array<i32: 1>} : vector<32x8xi32>
    %c4_i32 = arith.constant 4 : i32
    %2 = vector.broadcast %c4_i32 : i32 to vector<32x8xi32>
    %3 = arith.muli %1, %2 : vector<32x8xi32>
    %4 = arith.cmpi sge, %0, %3 : vector<32x8xi32>
    %c1_i32 = arith.constant 1 : i32
    %5 = vector.broadcast %c1_i32 : i32 to vector<32x8xi32>
    %6 = arith.addi %1, %5 : vector<32x8xi32>
    %c4_i32_0 = arith.constant 4 : i32
    %7 = vector.broadcast %c4_i32_0 : i32 to vector<32x8xi32>
    %8 = arith.muli %6, %7 : vector<32x8xi32>
    %9 = arith.cmpi slt, %0, %8 : vector<32x8xi32>
    %10 = arith.andi %4, %9 : vector<32x8xi1>
    %11 = arith.extui %10 : vector<32x8xi1> to vector<32x8xi32>
    %12 = arith.sitofp %11 : vector<32x8xi32> to vector<32x8xf32>
    %13 = tpu.iota {dimensions = array<i32: 1>} : vector<8x32xi32>
    %14 = tpu.iota {dimensions = array<i32: 0>} : vector<8x32xi32>
    %c4_i32_1 = arith.constant 4 : i32
    %15 = vector.broadcast %c4_i32_1 : i32 to vector<8x32xi32>
    %16 = arith.muli %14, %15 : vector<8x32xi32>
    %17 = arith.cmpi sge, %13, %16 : vector<8x32xi32>
    %c1_i32_2 = arith.constant 1 : i32
    %18 = vector.broadcast %c1_i32_2 : i32 to vector<8x32xi32>
    %19 = arith.addi %14, %18 : vector<8x32xi32>
    %c4_i32_3 = arith.constant 4 : i32
    %20 = vector.broadcast %c4_i32_3 : i32 to vector<8x32xi32>
    %21 = arith.muli %19, %20 : vector<8x32xi32>
    %22 = arith.cmpi slt, %13, %21 : vector<8x32xi32>
    %23 = arith.andi %17, %22 : vector<8x32xi1>
    %24 = arith.extui %23 : vector<8x32xi1> to vector<8x32xi32>
    %25 = arith.sitofp %24 : vector<8x32xi32> to vector<8x32xf32>
    %c0 = arith.constant 0 : index
    %c0_4 = arith.constant 0 : index
    %c0_5 = arith.constant 0 : index
    %26 = vector.load %arg1[%c0, %c0_4, %c0_5] : memref<1x2x32xf32, #tpu.memory_space<vmem>>, vector<1x2x32xf32>
    %27 = vector.shape_cast %26 : vector<1x2x32xf32> to vector<2x32xf32>
    %c0_6 = arith.constant 0 : index
    %c0_7 = arith.constant 0 : index
    %c0_8 = arith.constant 0 : index
    %28 = vector.load %arg2[%c0_6, %c0_7, %c0_8] : memref<1x2x32xf32, #tpu.memory_space<vmem>>, vector<1x2x32xf32>
    %29 = vector.shape_cast %28 : vector<1x2x32xf32> to vector<2x32xf32>
    %c0_9 = arith.constant 0 : index
    %c0_10 = arith.constant 0 : index
    %c0_11 = arith.constant 0 : index
    %30 = vector.load %arg3[%c0_9, %c0_10, %c0_11] : memref<1x16x32xbf16, #tpu.memory_space<vmem>>, vector<1x16x32xbf16>
    %31 = vector.shape_cast %30 : vector<1x16x32xbf16> to vector<16x32xbf16>
    %c0_12 = arith.constant 0 : index
    %c0_13 = arith.constant 0 : index
    %c0_14 = arith.constant 0 : index
    %32 = vector.load %arg4[%c0_12, %c0_13, %c0_14] : memref<1x24x32xbf16, #tpu.memory_space<vmem>>, vector<1x24x32xbf16>
    %33 = vector.shape_cast %32 : vector<1x24x32xbf16> to vector<24x32xbf16>
    %c0_15 = arith.constant 0 : index
    %c0_16 = arith.constant 0 : index
    %34 = vector.load %arg5[%c0_15, %c0_16] : memref<32x32xbf16, #tpu.memory_space<vmem>>, vector<32x32xbf16>
    %c0_17 = arith.constant 0 : index
    %c0_18 = arith.constant 0 : index
    %35 = vector.load %arg7[%c0_17, %c0_18] : memref<32x64xbf16, #tpu.memory_space<vmem>>, vector<32x64xbf16>
    %c0_19 = arith.constant 0 : index
    %c0_20 = arith.constant 0 : index
    %36 = vector.load %arg9[%c0_19, %c0_20] : memref<32x32xbf16, #tpu.memory_space<vmem>>, vector<32x32xbf16>
    %c0_21 = arith.constant 0 : index
    %c0_22 = arith.constant 0 : index
    %37 = vector.load %arg6[%c0_21, %c0_22] : memref<1x32xf32, #tpu.memory_space<vmem>>, vector<1x32xf32>
    %c0_23 = arith.constant 0 : index
    %c0_24 = arith.constant 0 : index
    %38 = vector.load %arg8[%c0_23, %c0_24] : memref<1x64xf32, #tpu.memory_space<vmem>>, vector<1x64xf32>
    %c0_25 = arith.constant 0 : index
    %c0_26 = arith.constant 0 : index
    %39 = vector.load %arg10[%c0_25, %c0_26] : memref<1x32xf32, #tpu.memory_space<vmem>>, vector<1x32xf32>
    %40 = arith.truncf %27 : vector<2x32xf32> to vector<2x32xbf16>
    %cst = arith.constant dense<0.000000e+00> : vector<2x32xf32>
    %41 = tpu.matmul %40, %34, %cst {dimension_numbers = #tpu.dot_dimension_numbers<[1], [0], [0], [1], [0, 0, 1, 1], [], []>} : vector<2x32xbf16>, vector<32x32xbf16>, vector<2x32xf32> -> vector<2x32xf32>
    %42 = vector.broadcast %37 : vector<1x32xf32> to vector<2x32xf32>
    %43 = arith.addf %41, %42 : vector<2x32xf32>
    %44 = arith.truncf %29 : vector<2x32xf32> to vector<2x32xbf16>
    %cst_27 = arith.constant dense<0.000000e+00> : vector<2x32xf32>
    %45 = tpu.matmul %44, %34, %cst_27 {dimension_numbers = #tpu.dot_dimension_numbers<[1], [0], [0], [1], [0, 0, 1, 1], [], []>} : vector<2x32xbf16>, vector<32x32xbf16>, vector<2x32xf32> -> vector<2x32xf32>
    %46 = vector.broadcast %37 : vector<1x32xf32> to vector<2x32xf32>
    %47 = arith.addf %45, %46 : vector<2x32xf32>
    %cst_28 = arith.constant dense<0.000000e+00> : vector<16x64xf32>
    %48 = tpu.matmul %31, %35, %cst_28 {dimension_numbers = #tpu.dot_dimension_numbers<[1], [0], [0], [1], [0, 0, 1, 1], [], []>} : vector<16x32xbf16>, vector<32x64xbf16>, vector<16x64xf32> -> vector<16x64xf32>
    %49 = vector.broadcast %38 : vector<1x64xf32> to vector<16x64xf32>
    %50 = arith.addf %48, %49 : vector<16x64xf32>
    %cst_29 = arith.constant dense<0.000000e+00> : vector<24x64xf32>
    %51 = tpu.matmul %33, %35, %cst_29 {dimension_numbers = #tpu.dot_dimension_numbers<[1], [0], [0], [1], [0, 0, 1, 1], [], []>} : vector<24x32xbf16>, vector<32x64xbf16>, vector<24x64xf32> -> vector<24x64xf32>
    %52 = vector.broadcast %38 : vector<1x64xf32> to vector<24x64xf32>
    %53 = arith.addf %51, %52 : vector<24x64xf32>
    %54 = vector.extract_strided_slice %50 {offsets = [0, 0], sizes = [16, 32], strides = [1, 1]} : vector<16x64xf32> to vector<16x32xf32>
    %55 = vector.extract_strided_slice %50 {offsets = [0, 32], sizes = [16, 32], strides = [1, 1]} : vector<16x64xf32> to vector<16x32xf32>
    %56 = vector.extract_strided_slice %53 {offsets = [0, 0], sizes = [24, 32], strides = [1, 1]} : vector<24x64xf32> to vector<24x32xf32>
    %57 = vector.extract_strided_slice %53 {offsets = [0, 32], sizes = [24, 32], strides = [1, 1]} : vector<24x64xf32> to vector<24x32xf32>
    %cst_30 = arith.constant 1.000000e+00 : f32
    %58 = vector.broadcast %cst_30 : f32 to vector<1x8xf32>
    %cst_31 = arith.constant 1.000000e+00 : f32
    %59 = vector.broadcast %cst_31 : f32 to vector<1x12xf32>
    %60 = vector.extract_strided_slice %43 {offsets = [0, 0], sizes = [1, 32], strides = [1, 1]} : vector<2x32xf32> to vector<1x32xf32>
    %61 = vector.extract_strided_slice %56 {offsets = [0, 0], sizes = [12, 32], strides = [1, 1]} : vector<24x32xf32> to vector<12x32xf32>
    %62 = vector.extract_strided_slice %57 {offsets = [0, 0], sizes = [12, 32], strides = [1, 1]} : vector<24x32xf32> to vector<12x32xf32>
    %63 = vector.broadcast %60 : vector<1x32xf32> to vector<12x32xf32>
    %64 = arith.mulf %63, %61 : vector<12x32xf32>
    %cst_32 = arith.constant dense<0.000000e+00> : vector<12x8xf32>
    %65 = tpu.matmul %64, %12, %cst_32 {dimension_numbers = #tpu.dot_dimension_numbers<[1], [0], [0], [1], [0, 0, 1, 1], [], []>} : vector<12x32xf32>, vector<32x8xf32>, vector<12x8xf32> -> vector<12x8xf32>
    %cst_33 = arith.constant dense<0xFF800000> : vector<8xf32>
    %66 = vector.multi_reduction <maximumf>, %65, %cst_33 [0] : vector<12x8xf32> to vector<8xf32>
    %67 = vector.shape_cast %66 : vector<8xf32> to vector<1x8xf32>
    %68 = vector.broadcast %67 : vector<1x8xf32> to vector<12x8xf32>
    %69 = arith.subf %65, %68 : vector<12x8xf32>
    %70 = math.exp %69 : vector<12x8xf32>
    %cst_34 = arith.constant dense<0.000000e+00> : vector<8xf32>
    %71 = vector.multi_reduction <add>, %70, %cst_34 [0] : vector<12x8xf32> to vector<8xf32>
    %72 = vector.shape_cast %71 : vector<8xf32> to vector<1x8xf32>
    %cst_35 = arith.constant dense<0.000000e+00> : vector<12x32xf32>
    %73 = tpu.matmul %70, %25, %cst_35 {dimension_numbers = #tpu.dot_dimension_numbers<[1], [0], [0], [1], [0, 0, 1, 1], [], []>} : vector<12x8xf32>, vector<8x32xf32>, vector<12x32xf32> -> vector<12x32xf32>
    %74 = arith.mulf %73, %62 : vector<12x32xf32>
    %cst_36 = arith.constant dense<0.000000e+00> : vector<1x32xf32>
    %75 = tpu.matmul %59, %74, %cst_36 {dimension_numbers = #tpu.dot_dimension_numbers<[1], [0], [0], [1], [0, 0, 1, 1], [], []>} : vector<1x12xf32>, vector<12x32xf32>, vector<1x32xf32> -> vector<1x32xf32>
    %76 = tpu.reciprocal %72 {approx = true} : vector<1x8xf32> -> vector<1x8xf32>
    %cst_37 = arith.constant dense<0.000000e+00> : vector<1x32xf32>
    %77 = tpu.matmul %76, %25, %cst_37 {dimension_numbers = #tpu.dot_dimension_numbers<[1], [0], [0], [1], [0, 0, 1, 1], [], []>} : vector<1x8xf32>, vector<8x32xf32>, vector<1x32xf32> -> vector<1x32xf32>
    %78 = arith.mulf %75, %77 : vector<1x32xf32>
    %79 = vector.extract_strided_slice %47 {offsets = [0, 0], sizes = [1, 32], strides = [1, 1]} : vector<2x32xf32> to vector<1x32xf32>
    %80 = vector.extract_strided_slice %54 {offsets = [0, 0], sizes = [8, 32], strides = [1, 1]} : vector<16x32xf32> to vector<8x32xf32>
    %81 = vector.extract_strided_slice %55 {offsets = [0, 0], sizes = [8, 32], strides = [1, 1]} : vector<16x32xf32> to vector<8x32xf32>
    %82 = vector.broadcast %79 : vector<1x32xf32> to vector<8x32xf32>
    %83 = arith.mulf %82, %80 : vector<8x32xf32>
    %cst_38 = arith.constant dense<0.000000e+00> : vector<8x8xf32>
    %84 = tpu.matmul %83, %12, %cst_38 {dimension_numbers = #tpu.dot_dimension_numbers<[1], [0], [0], [1], [0, 0, 1, 1], [], []>} : vector<8x32xf32>, vector<32x8xf32>, vector<8x8xf32> -> vector<8x8xf32>
    %cst_39 = arith.constant dense<0xFF800000> : vector<8xf32>
    %85 = vector.multi_reduction <maximumf>, %84, %cst_39 [0] : vector<8x8xf32> to vector<8xf32>
    %86 = vector.shape_cast %85 : vector<8xf32> to vector<1x8xf32>
    %87 = vector.broadcast %86 : vector<1x8xf32> to vector<8x8xf32>
    %88 = arith.subf %84, %87 : vector<8x8xf32>
    %89 = math.exp %88 : vector<8x8xf32>
    %cst_40 = arith.constant dense<0.000000e+00> : vector<8xf32>
    %90 = vector.multi_reduction <add>, %89, %cst_40 [0] : vector<8x8xf32> to vector<8xf32>
    %91 = vector.shape_cast %90 : vector<8xf32> to vector<1x8xf32>
    %cst_41 = arith.constant dense<0.000000e+00> : vector<8x32xf32>
    %92 = tpu.matmul %89, %25, %cst_41 {dimension_numbers = #tpu.dot_dimension_numbers<[1], [0], [0], [1], [0, 0, 1, 1], [], []>} : vector<8x8xf32>, vector<8x32xf32>, vector<8x32xf32> -> vector<8x32xf32>
    %93 = arith.mulf %92, %81 : vector<8x32xf32>
    %cst_42 = arith.constant dense<0.000000e+00> : vector<1x32xf32>
    %94 = tpu.matmul %58, %93, %cst_42 {dimension_numbers = #tpu.dot_dimension_numbers<[1], [0], [0], [1], [0, 0, 1, 1], [], []>} : vector<1x8xf32>, vector<8x32xf32>, vector<1x32xf32> -> vector<1x32xf32>
    %95 = tpu.reciprocal %91 {approx = true} : vector<1x8xf32> -> vector<1x8xf32>
    %cst_43 = arith.constant dense<0.000000e+00> : vector<1x32xf32>
    %96 = tpu.matmul %95, %25, %cst_43 {dimension_numbers = #tpu.dot_dimension_numbers<[1], [0], [0], [1], [0, 0, 1, 1], [], []>} : vector<1x8xf32>, vector<8x32xf32>, vector<1x32xf32> -> vector<1x32xf32>
    %97 = arith.mulf %94, %96 : vector<1x32xf32>
    %98 = arith.truncf %78 : vector<1x32xf32> to vector<1x32xbf16>
    %c0_44 = arith.constant 0 : index
    %c0_45 = arith.constant 0 : index
    %99 = vector.load %arg14[%c0_44, %c0_45] : memref<4x32xbf16, #tpu.memory_space<vmem>>, vector<1x32xbf16>
    tpu.vector_store %arg14[%c0_44, %c0_45], %98 {strides = array<i32>} : memref<4x32xbf16, #tpu.memory_space<vmem>>, vector<1x32xbf16>,
    %100 = arith.truncf %97 : vector<1x32xf32> to vector<1x32xbf16>
    %c2 = arith.constant 2 : index
    %c0_46 = arith.constant 0 : index
    %101 = vector.load %arg14[%c2, %c0_46] : memref<4x32xbf16, #tpu.memory_space<vmem>>, vector<1x32xbf16>
    tpu.vector_store %arg14[%c2, %c0_46], %100 {strides = array<i32>} : memref<4x32xbf16, #tpu.memory_space<vmem>>, vector<1x32xbf16>,
    %102 = vector.extract_strided_slice %43 {offsets = [1, 0], sizes = [1, 32], strides = [1, 1]} : vector<2x32xf32> to vector<1x32xf32>
    %103 = vector.extract_strided_slice %56 {offsets = [12, 0], sizes = [12, 32], strides = [1, 1]} : vector<24x32xf32> to vector<12x32xf32>
    %104 = vector.extract_strided_slice %57 {offsets = [12, 0], sizes = [12, 32], strides = [1, 1]} : vector<24x32xf32> to vector<12x32xf32>
    %105 = vector.broadcast %102 : vector<1x32xf32> to vector<12x32xf32>
    %106 = arith.mulf %105, %103 : vector<12x32xf32>
    %cst_47 = arith.constant dense<0.000000e+00> : vector<12x8xf32>
    %107 = tpu.matmul %106, %12, %cst_47 {dimension_numbers = #tpu.dot_dimension_numbers<[1], [0], [0], [1], [0, 0, 1, 1], [], []>} : vector<12x32xf32>, vector<32x8xf32>, vector<12x8xf32> -> vector<12x8xf32>
    %cst_48 = arith.constant dense<0xFF800000> : vector<8xf32>
    %108 = vector.multi_reduction <maximumf>, %107, %cst_48 [0] : vector<12x8xf32> to vector<8xf32>
    %109 = vector.shape_cast %108 : vector<8xf32> to vector<1x8xf32>
    %110 = vector.broadcast %109 : vector<1x8xf32> to vector<12x8xf32>
    %111 = arith.subf %107, %110 : vector<12x8xf32>
    %112 = math.exp %111 : vector<12x8xf32>
    %cst_49 = arith.constant dense<0.000000e+00> : vector<8xf32>
    %113 = vector.multi_reduction <add>, %112, %cst_49 [0] : vector<12x8xf32> to vector<8xf32>
    %114 = vector.shape_cast %113 : vector<8xf32> to vector<1x8xf32>
    %cst_50 = arith.constant dense<0.000000e+00> : vector<12x32xf32>
    %115 = tpu.matmul %112, %25, %cst_50 {dimension_numbers = #tpu.dot_dimension_numbers<[1], [0], [0], [1], [0, 0, 1, 1], [], []>} : vector<12x8xf32>, vector<8x32xf32>, vector<12x32xf32> -> vector<12x32xf32>
    %116 = arith.mulf %115, %104 : vector<12x32xf32>
    %cst_51 = arith.constant dense<0.000000e+00> : vector<1x32xf32>
    %117 = tpu.matmul %59, %116, %cst_51 {dimension_numbers = #tpu.dot_dimension_numbers<[1], [0], [0], [1], [0, 0, 1, 1], [], []>} : vector<1x12xf32>, vector<12x32xf32>, vector<1x32xf32> -> vector<1x32xf32>
    %118 = tpu.reciprocal %114 {approx = true} : vector<1x8xf32> -> vector<1x8xf32>
    %cst_52 = arith.constant dense<0.000000e+00> : vector<1x32xf32>
    %119 = tpu.matmul %118, %25, %cst_52 {dimension_numbers = #tpu.dot_dimension_numbers<[1], [0], [0], [1], [0, 0, 1, 1], [], []>} : vector<1x8xf32>, vector<8x32xf32>, vector<1x32xf32> -> vector<1x32xf32>
    %120 = arith.mulf %117, %119 : vector<1x32xf32>
    %121 = vector.extract_strided_slice %47 {offsets = [1, 0], sizes = [1, 32], strides = [1, 1]} : vector<2x32xf32> to vector<1x32xf32>
    %122 = vector.extract_strided_slice %54 {offsets = [8, 0], sizes = [8, 32], strides = [1, 1]} : vector<16x32xf32> to vector<8x32xf32>
    %123 = vector.extract_strided_slice %55 {offsets = [8, 0], sizes = [8, 32], strides = [1, 1]} : vector<16x32xf32> to vector<8x32xf32>
    %124 = vector.broadcast %121 : vector<1x32xf32> to vector<8x32xf32>
    %125 = arith.mulf %124, %122 : vector<8x32xf32>
    %cst_53 = arith.constant dense<0.000000e+00> : vector<8x8xf32>
    %126 = tpu.matmul %125, %12, %cst_53 {dimension_numbers = #tpu.dot_dimension_numbers<[1], [0], [0], [1], [0, 0, 1, 1], [], []>} : vector<8x32xf32>, vector<32x8xf32>, vector<8x8xf32> -> vector<8x8xf32>
    %cst_54 = arith.constant dense<0xFF800000> : vector<8xf32>
    %127 = vector.multi_reduction <maximumf>, %126, %cst_54 [0] : vector<8x8xf32> to vector<8xf32>
    %128 = vector.shape_cast %127 : vector<8xf32> to vector<1x8xf32>
    %129 = vector.broadcast %128 : vector<1x8xf32> to vector<8x8xf32>
    %130 = arith.subf %126, %129 : vector<8x8xf32>
    %131 = math.exp %130 : vector<8x8xf32>
    %cst_55 = arith.constant dense<0.000000e+00> : vector<8xf32>
    %132 = vector.multi_reduction <add>, %131, %cst_55 [0] : vector<8x8xf32> to vector<8xf32>
    %133 = vector.shape_cast %132 : vector<8xf32> to vector<1x8xf32>
    %cst_56 = arith.constant dense<0.000000e+00> : vector<8x32xf32>
    %134 = tpu.matmul %131, %25, %cst_56 {dimension_numbers = #tpu.dot_dimension_numbers<[1], [0], [0], [1], [0, 0, 1, 1], [], []>} : vector<8x8xf32>, vector<8x32xf32>, vector<8x32xf32> -> vector<8x32xf32>
    %135 = arith.mulf %134, %123 : vector<8x32xf32>
    %cst_57 = arith.constant dense<0.000000e+00> : vector<1x32xf32>
    %136 = tpu.matmul %58, %135, %cst_57 {dimension_numbers = #tpu.dot_dimension_numbers<[1], [0], [0], [1], [0, 0, 1, 1], [], []>} : vector<1x8xf32>, vector<8x32xf32>, vector<1x32xf32> -> vector<1x32xf32>
    %137 = tpu.reciprocal %133 {approx = true} : vector<1x8xf32> -> vector<1x8xf32>
    %cst_58 = arith.constant dense<0.000000e+00> : vector<1x32xf32>
    %138 = tpu.matmul %137, %25, %cst_58 {dimension_numbers = #tpu.dot_dimension_numbers<[1], [0], [0], [1], [0, 0, 1, 1], [], []>} : vector<1x8xf32>, vector<8x32xf32>, vector<1x32xf32> -> vector<1x32xf32>
    %139 = arith.mulf %136, %138 : vector<1x32xf32>
    %140 = arith.truncf %120 : vector<1x32xf32> to vector<1x32xbf16>
    %c1 = arith.constant 1 : index
    %c0_59 = arith.constant 0 : index
    %141 = vector.load %arg14[%c1, %c0_59] : memref<4x32xbf16, #tpu.memory_space<vmem>>, vector<1x32xbf16>
    tpu.vector_store %arg14[%c1, %c0_59], %140 {strides = array<i32>} : memref<4x32xbf16, #tpu.memory_space<vmem>>, vector<1x32xbf16>,
    %142 = arith.truncf %139 : vector<1x32xf32> to vector<1x32xbf16>
    %c3 = arith.constant 3 : index
    %c0_60 = arith.constant 0 : index
    %143 = vector.load %arg14[%c3, %c0_60] : memref<4x32xbf16, #tpu.memory_space<vmem>>, vector<1x32xbf16>
    tpu.vector_store %arg14[%c3, %c0_60], %142 {strides = array<i32>} : memref<4x32xbf16, #tpu.memory_space<vmem>>, vector<1x32xbf16>,
    %c0_61 = arith.constant 0 : index
    %c0_62 = arith.constant 0 : index
    %144 = vector.load %arg14[%c0_61, %c0_62] : memref<4x32xbf16, #tpu.memory_space<vmem>>, vector<4x32xbf16>
    %cst_63 = arith.constant dense<0.000000e+00> : vector<4x32xf32>
    %145 = tpu.matmul %144, %36, %cst_63 {dimension_numbers = #tpu.dot_dimension_numbers<[1], [0], [0], [1], [0, 0, 1, 1], [], []>} : vector<4x32xbf16>, vector<32x32xbf16>, vector<4x32xf32> -> vector<4x32xf32>
    %146 = vector.broadcast %39 : vector<1x32xf32> to vector<4x32xf32>
    %147 = arith.addf %145, %146 : vector<4x32xf32>
    %148 = vector.extract_strided_slice %147 {offsets = [0, 0], sizes = [2, 32], strides = [1, 1]} : vector<4x32xf32> to vector<2x32xf32>
    %149 = vector.extract_strided_slice %147 {offsets = [2, 0], sizes = [2, 32], strides = [1, 1]} : vector<4x32xf32> to vector<2x32xf32>
    %150 = arith.subf %27, %29 : vector<2x32xf32>
    %151 = math.absf %150 : vector<2x32xf32>
    %c0_64 = arith.constant 0 : index
    %c0_65 = arith.constant 0 : index
    %152 = vector.load %arg11[%c0_64, %c0_65] : memref<160x2xf32, #tpu.memory_space<vmem>>, vector<160x2xf32>
    %153 = vector.extract_strided_slice %152 {offsets = [0, 0], sizes = [32, 2], strides = [1, 1]} : vector<160x2xf32> to vector<32x2xf32>
    %cst_66 = arith.constant dense<0.000000e+00> : vector<2x2xf32>
    %154 = tpu.matmul %27, %153, %cst_66 {dimension_numbers = #tpu.dot_dimension_numbers<[1], [0], [0], [1], [0, 0, 1, 1], [], []>} : vector<2x32xf32>, vector<32x2xf32>, vector<2x2xf32> -> vector<2x2xf32>
    %155 = vector.extract_strided_slice %152 {offsets = [32, 0], sizes = [32, 2], strides = [1, 1]} : vector<160x2xf32> to vector<32x2xf32>
    %cst_67 = arith.constant dense<0.000000e+00> : vector<2x2xf32>
    %156 = tpu.matmul %29, %155, %cst_67 {dimension_numbers = #tpu.dot_dimension_numbers<[1], [0], [0], [1], [0, 0, 1, 1], [], []>} : vector<2x32xf32>, vector<32x2xf32>, vector<2x2xf32> -> vector<2x2xf32>
    %157 = arith.addf %154, %156 : vector<2x2xf32>
    %158 = vector.extract_strided_slice %152 {offsets = [64, 0], sizes = [32, 2], strides = [1, 1]} : vector<160x2xf32> to vector<32x2xf32>
    %cst_68 = arith.constant dense<0.000000e+00> : vector<2x2xf32>
    %159 = tpu.matmul %151, %158, %cst_68 {dimension_numbers = #tpu.dot_dimension_numbers<[1], [0], [0], [1], [0, 0, 1, 1], [], []>} : vector<2x32xf32>, vector<32x2xf32>, vector<2x2xf32> -> vector<2x2xf32>
    %160 = arith.addf %157, %159 : vector<2x2xf32>
    %161 = vector.extract_strided_slice %152 {offsets = [96, 0], sizes = [32, 2], strides = [1, 1]} : vector<160x2xf32> to vector<32x2xf32>
    %cst_69 = arith.constant dense<0.000000e+00> : vector<2x2xf32>
    %162 = tpu.matmul %148, %161, %cst_69 {dimension_numbers = #tpu.dot_dimension_numbers<[1], [0], [0], [1], [0, 0, 1, 1], [], []>} : vector<2x32xf32>, vector<32x2xf32>, vector<2x2xf32> -> vector<2x2xf32>
    %163 = arith.addf %160, %162 : vector<2x2xf32>
    %164 = vector.extract_strided_slice %152 {offsets = [128, 0], sizes = [32, 2], strides = [1, 1]} : vector<160x2xf32> to vector<32x2xf32>
    %cst_70 = arith.constant dense<0.000000e+00> : vector<2x2xf32>
    %165 = tpu.matmul %149, %164, %cst_70 {dimension_numbers = #tpu.dot_dimension_numbers<[1], [0], [0], [1], [0, 0, 1, 1], [], []>} : vector<2x32xf32>, vector<32x2xf32>, vector<2x2xf32> -> vector<2x2xf32>
    %166 = arith.addf %163, %165 : vector<2x2xf32>
    %c0_71 = arith.constant 0 : index
    %c0_72 = arith.constant 0 : index
    %167 = vector.load %arg12[%c0_71, %c0_72] : memref<1x2xf32, #tpu.memory_space<vmem>>, vector<1x2xf32>
    %168 = vector.broadcast %167 : vector<1x2xf32> to vector<2x2xf32>
    %169 = arith.addf %166, %168 : vector<2x2xf32>
    %c0_73 = arith.constant 0 : index
    %c0_74 = arith.constant 0 : index
    %c0_75 = arith.constant 0 : index
    %170 = vector.load %arg13[%c0_73, %c0_74, %c0_75] : memref<1x2x2xf32, #tpu.memory_space<vmem>>, vector<1x2x2xf32>
    %171 = vector.shape_cast %170 : vector<1x2x2xf32> to vector<2x2xf32>
    %172 = vector.shape_cast %169 : vector<2x2xf32> to vector<1x2x2xf32>
    tpu.vector_store %arg13[%c0_73, %c0_74, %c0_75], %172 {strides = array<i32>} : memref<1x2x2xf32, #tpu.memory_space<vmem>>, vector<1x2x2xf32>,
    return
  }
  func.func @transform_0(%arg0: i32) -> (i32, i32, i32) {
    %c0_i32 = arith.constant 0 : i32
    %c0_i32_0 = arith.constant 0 : i32
    %c0_i32_1 = arith.constant 0 : i32
    return %arg0, %c0_i32, %c0_i32_0 : i32, i32, i32
  }
  func.func @transform_1(%arg0: i32) -> (i32, i32, i32) {
    %c0_i32 = arith.constant 0 : i32
    %c0_i32_0 = arith.constant 0 : i32
    %c0_i32_1 = arith.constant 0 : i32
    return %arg0, %c0_i32, %c0_i32_0 : i32, i32, i32
  }
  func.func @transform_2(%arg0: i32) -> (i32, i32, i32) {
    %c0_i32 = arith.constant 0 : i32
    %c0_i32_0 = arith.constant 0 : i32
    %c0_i32_1 = arith.constant 0 : i32
    return %arg0, %c0_i32, %c0_i32_0 : i32, i32, i32
  }
  func.func @transform_3(%arg0: i32) -> (i32, i32, i32) {
    %c0_i32 = arith.constant 0 : i32
    %c0_i32_0 = arith.constant 0 : i32
    %c0_i32_1 = arith.constant 0 : i32
    return %arg0, %c0_i32, %c0_i32_0 : i32, i32, i32
  }
  func.func @transform_4(%arg0: i32) -> (i32, i32) {
    %c0_i32 = arith.constant 0 : i32
    %c0_i32_0 = arith.constant 0 : i32
    %c0_i32_1 = arith.constant 0 : i32
    return %c0_i32, %c0_i32_0 : i32, i32
  }
  func.func @transform_5(%arg0: i32) -> (i32, i32) {
    %c0_i32 = arith.constant 0 : i32
    %c0_i32_0 = arith.constant 0 : i32
    %c0_i32_1 = arith.constant 0 : i32
    return %c0_i32, %c0_i32_0 : i32, i32
  }
  func.func @transform_6(%arg0: i32) -> (i32, i32) {
    %c0_i32 = arith.constant 0 : i32
    %c0_i32_0 = arith.constant 0 : i32
    %c0_i32_1 = arith.constant 0 : i32
    return %c0_i32, %c0_i32_0 : i32, i32
  }
  func.func @transform_7(%arg0: i32) -> (i32, i32) {
    %c0_i32 = arith.constant 0 : i32
    %c0_i32_0 = arith.constant 0 : i32
    %c0_i32_1 = arith.constant 0 : i32
    return %c0_i32, %c0_i32_0 : i32, i32
  }
  func.func @transform_8(%arg0: i32) -> (i32, i32) {
    %c0_i32 = arith.constant 0 : i32
    %c0_i32_0 = arith.constant 0 : i32
    %c0_i32_1 = arith.constant 0 : i32
    return %c0_i32, %c0_i32_0 : i32, i32
  }
  func.func @transform_9(%arg0: i32) -> (i32, i32) {
    %c0_i32 = arith.constant 0 : i32
    %c0_i32_0 = arith.constant 0 : i32
    %c0_i32_1 = arith.constant 0 : i32
    return %c0_i32, %c0_i32_0 : i32, i32
  }
  func.func @transform_10(%arg0: i32) -> (i32, i32) {
    %c0_i32 = arith.constant 0 : i32
    %c0_i32_0 = arith.constant 0 : i32
    %c0_i32_1 = arith.constant 0 : i32
    return %c0_i32, %c0_i32_0 : i32, i32
  }
  func.func @transform_11(%arg0: i32) -> (i32, i32) {
    %c0_i32 = arith.constant 0 : i32
    %c0_i32_0 = arith.constant 0 : i32
    %c0_i32_1 = arith.constant 0 : i32
    return %c0_i32, %c0_i32_0 : i32, i32
  }
  func.func @transform_12(%arg0: i32) -> (i32, i32, i32) {
    %c0_i32 = arith.constant 0 : i32
    %c0_i32_0 = arith.constant 0 : i32
    %c0_i32_1 = arith.constant 0 : i32
    return %arg0, %c0_i32, %c0_i32_0 : i32, i32, i32
  }
}

</mosaic_0001>

<llo_original>
// kernel: tpu_custom_call.1
$region0: #{tpu_custom_call.1}
  #allocation0 [shape = 'u32[]', space=smem, size = 0x4, offset = 0x4, fixed_abs, tag = 'smem constant byte address 0x4 - core index']
  #allocation1 [shape = 'u32[144,128]{1,0:T(1,128)}', space=vmem, size = 0x12000, scoped, tag = 'internal scratch']
  #allocation2 [shape = 'bf16[4,32]{1,0:T(4,128)(2,1)}', space=vmem, size = 0x400, scoped, tag = 'scratch operand']
  %s0 = inlined_call_operand.hbm [shape: f32[1,2,32], index: 0, kind: input, shape index: {}]
  %s1 = inlined_call_operand.hbm [shape: f32[1,2,32], index: 1, kind: input, shape index: {}]
  %s2 = inlined_call_operand.hbm [shape: bf16[1,16,32], index: 2, kind: input, shape index: {}]
  %s3 = inlined_call_operand.hbm [shape: bf16[1,24,32], index: 3, kind: input, shape index: {}]
  %s4 = inlined_call_operand.hbm [shape: bf16[32,32], index: 4, kind: input, shape index: {}]
  %s5 = inlined_call_operand.hbm [shape: f32[1,32], index: 5, kind: input, shape index: {}]
  %s6 = inlined_call_operand.hbm [shape: bf16[32,64], index: 6, kind: input, shape index: {}]
  %s7 = inlined_call_operand.hbm [shape: f32[1,64], index: 7, kind: input, shape index: {}]
  %s8 = inlined_call_operand.hbm [shape: bf16[32,32], index: 8, kind: input, shape index: {}]
  %s9 = inlined_call_operand.hbm [shape: f32[1,32], index: 9, kind: input, shape index: {}]
  %s10 = inlined_call_operand.hbm [shape: f32[160,2], index: 10, kind: input, shape index: {}]
  %s11 = inlined_call_operand.hbm [shape: f32[1,2], index: 11, kind: input, shape index: {}]
  %s12 = inlined_call_operand.hbm [shape: f32[1,2,2], index: 12, kind: output, shape index: {}]
  %s13 = sld [smem:[#allocation0]]
  $region106: #{tpu_custom_call.1} parent=0
    _
  %s15 = ssub.s32 1, %s13
  %s16 = scalar_select 0, %s15, %s13
  $region1: #{tpu_custom_call.1} parent=0
    #allocation3 [shape = 'u8[1024]{0}', space=vmem, size = 0x400, scoped, tag = 'input window, operand 0, single buffered']
    #allocation4 [shape = 's32[1]{0}', space=sflag, size = 0x4, scoped, tag = 'scoped memory for tpu_custom_call.1']
    #allocation5 [shape = 's32[1]{0}', space=sflag, size = 0x4, scoped, tag = 'scoped memory for tpu_custom_call.1']
    #allocation6 [shape = 'u8[1024]{0}', space=vmem, size = 0x400, scoped, tag = 'input window, operand 1, single buffered']
    #allocation7 [shape = 's32[1]{0}', space=sflag, size = 0x4, scoped, tag = 'scoped memory for tpu_custom_call.1']
    #allocation8 [shape = 'u8[4096]{0}', space=vmem, size = 0x1000, scoped, tag = 'input window, operand 2, single buffered']
    #allocation9 [shape = 'u8[6144]{0}', space=vmem, size = 0x1800, scoped, tag = 'input window, operand 3, single buffered']
    #allocation10 [shape = 's32[1]{0}', space=sflag, size = 0x4, scoped, tag = 'scoped memory for tpu_custom_call.1']
    #allocation11 [shape = 'u8[8192]{0}', space=vmem, size = 0x2000, scoped, tag = 'input window, operand 4, single buffered']
    #allocation12 [shape = 'u8[512]{0}', space=vmem, size = 0x400, scoped, tag = 'input window, operand 5, single buffered']
    #allocation13 [shape = 's32[1]{0}', space=sflag, size = 0x4, scoped, tag = 'scoped memory for tpu_custom_call.1']
    #allocation14 [shape = 'u8[8192]{0}', space=vmem, size = 0x2000, scoped, tag = 'input window, operand 6, single buffered']
    #allocation15 [shape = 'u8[512]{0}', space=vmem, size = 0x400, scoped, tag = 'input window, operand 7, single buffered']
    #allocation16 [shape = 's32[1]{0}', space=sflag, size = 0x4, scoped, tag = 'scoped memory for tpu_custom_call.1']
    #allocation17 [shape = 'u8[8192]{0}', space=vmem, size = 0x2000, scoped, tag = 'input window, operand 8, single buffered']
    #allocation18 [shape = 'u8[512]{0}', space=vmem, size = 0x400, scoped, tag = 'input window, operand 9, single buffered']
    #allocation19 [shape = 's32[1]{0}', space=sflag, size = 0x4, scoped, tag = 'scoped memory for tpu_custom_call.1']
    #allocation20 [shape = 'u8[81920]{0}', space=vmem, size = 0x14000, scoped, tag = 'input window, operand 10, single buffered']
    #allocation21 [shape = 'u8[512]{0}', space=vmem, size = 0x400, scoped, tag = 'input window, operand 11, single buffered']
    #allocation22 [shape = 's32[1]{0}', space=sflag, size = 0x4, scoped, tag = 'scoped memory for tpu_custom_call.1']
    #allocation23 [shape = 'u8[1024]{0}', space=vmem, size = 0x400, scoped, tag = 'output window, operand 0, single buffered']
    %17 = vsyncpa [#allocation4], 0
    %18 = vsyncpa [#allocation7], 0
    %19 = vsyncpa [#allocation10], 0
    %20 = vsyncpa [#allocation13], 0
    %21 = vsyncpa [#allocation16], 0
    %22 = vsyncpa [#allocation19], 0
    %23 = vsyncpa [#allocation22], 0
    %24 = vsyncpa [#allocation5], 0
    // Predicated region
    $region2: #{tpu_custom_call.1} parent=1 // pred_check
      _
    $region3: #{tpu_custom_call.1} parent=1 // pred_check_branch
      %26 = sbr.rel (0) target = $region5
    $region4: #{tpu_custom_call.1} parent=1 // pred_region
      %s28 = ssub.s32 32, 32
      %29 = vsyncadd [#allocation4], %s28
      %s31 = sshll.u32 [#allocation3], 4
      %s32 = int_to_ptr.vmem [resolvable:$true] %s31
      %34 = dma.hbm_to_vmem [thread:$0]  %s0, 32, %s32, [#allocation4]
    $region5: #{tpu_custom_call.1} parent=1 // pred_fallthru
      _
    // Predicated region
    $region6: #{tpu_custom_call.1} parent=1 // pred_check
      _
    $region7: #{tpu_custom_call.1} parent=1 // pred_check_branch
      %36 = sbr.rel (0) target = $region9
    $region8: #{tpu_custom_call.1} parent=1 // pred_region
      %s38 = ssub.s32 32, 32
      %39 = vsyncadd [#allocation7], %s38
      %s41 = sshll.u32 [#allocation6], 4
      %s42 = int_to_ptr.vmem [resolvable:$true] %s41
      %44 = dma.hbm_to_vmem [thread:$0]  %s1, 32, %s42, [#allocation7]
    $region9: #{tpu_custom_call.1} parent=1 // pred_fallthru
      _
    // Predicated region
    $region10: #{tpu_custom_call.1} parent=1 // pred_check
      _
    $region11: #{tpu_custom_call.1} parent=1 // pred_check_branch
      %46 = sbr.rel (0) target = $region13
    $region12: #{tpu_custom_call.1} parent=1 // pred_region
      %s48 = ssub.s32 128, 128
      %49 = vsyncadd [#allocation7], %s48
      %s50 = sshll.u32 [#allocation8], 4
      %s51 = int_to_ptr.vmem [resolvable:$true] %s50
      %56 = dma.hbm_to_vmem [thread:$0]  %s2, 128, %s51, [#allocation7], 64, 64, 4
    $region13: #{tpu_custom_call.1} parent=1 // pred_fallthru
      _
    // Predicated region
    $region14: #{tpu_custom_call.1} parent=1 // pred_check
      _
    $region15: #{tpu_custom_call.1} parent=1 // pred_check_branch
      %58 = sbr.rel (0) target = $region17
    $region16: #{tpu_custom_call.1} parent=1 // pred_region
      %s60 = ssub.s32 192, 192
      %61 = vsyncadd [#allocation10], %s60
      %s62 = sshll.u32 [#allocation9], 4
      %s63 = int_to_ptr.vmem [resolvable:$true] %s62
      %68 = dma.hbm_to_vmem [thread:$0]  %s3, 192, %s63, [#allocation10], 64, 64, 4
    $region17: #{tpu_custom_call.1} parent=1 // pred_fallthru
      _
    // Predicated region
    $region18: #{tpu_custom_call.1} parent=1 // pred_check
      _
    $region19: #{tpu_custom_call.1} parent=1 // pred_check_branch
      %70 = sbr.rel (0) target = $region21
    $region20: #{tpu_custom_call.1} parent=1 // pred_region
      %s72 = ssub.s32 256, 256
      %73 = vsyncadd [#allocation10], %s72
      %s74 = sshll.u32 [#allocation11], 4
      %s75 = int_to_ptr.vmem [resolvable:$true] %s74
      %80 = dma.hbm_to_vmem [thread:$0]  %s4, 256, %s75, [#allocation10], 64, 64, 4
    $region21: #{tpu_custom_call.1} parent=1 // pred_fallthru
      _
    // Predicated region
    $region22: #{tpu_custom_call.1} parent=1 // pred_check
      _
    $region23: #{tpu_custom_call.1} parent=1 // pred_check_branch
      %82 = sbr.rel (0) target = $region25
    $region24: #{tpu_custom_call.1} parent=1 // pred_region
      %s84 = ssub.s32 16, 16
      %85 = vsyncadd [#allocation13], %s84
      %s87 = sshll.u32 [#allocation12], 4
      %s88 = int_to_ptr.vmem [resolvable:$true] %s87
      %90 = dma.hbm_to_vmem [thread:$0]  %s5, 16, %s88, [#allocation13]
    $region25: #{tpu_custom_call.1} parent=1 // pred_fallthru
      _
    // Predicated region
    $region26: #{tpu_custom_call.1} parent=1 // pred_check
      _
    $region27: #{tpu_custom_call.1} parent=1 // pred_check_branch
      %92 = sbr.rel (0) target = $region29
    $region28: #{tpu_custom_call.1} parent=1 // pred_region
      %s94 = ssub.s32 256, 256
      %95 = vsyncadd [#allocation13], %s94
      %s96 = sshll.u32 [#allocation14], 4
      %s97 = int_to_ptr.vmem [resolvable:$true] %s96
      %102 = dma.hbm_to_vmem [thread:$0]  %s6, 256, %s97, [#allocation13], 64, 64, 4
    $region29: #{tpu_custom_call.1} parent=1 // pred_fallthru
      _
    // Predicated region
    $region30: #{tpu_custom_call.1} parent=1 // pred_check
      _
    $region31: #{tpu_custom_call.1} parent=1 // pred_check_branch
      %104 = sbr.rel (0) target = $region33
    $region32: #{tpu_custom_call.1} parent=1 // pred_region
      %s106 = ssub.s32 16, 16
      %107 = vsyncadd [#allocation16], %s106
      %s109 = sshll.u32 [#allocation15], 4
      %s110 = int_to_ptr.vmem [resolvable:$true] %s109
      %112 = dma.hbm_to_vmem [thread:$0]  %s7, 16, %s110, [#allocation16]
    $region33: #{tpu_custom_call.1} parent=1 // pred_fallthru
      _
    // Predicated region
    $region34: #{tpu_custom_call.1} parent=1 // pred_check
      _
    $region35: #{tpu_custom_call.1} parent=1 // pred_check_branch
      %114 = sbr.rel (0) target = $region37
    $region36: #{tpu_custom_call.1} parent=1 // pred_region
      %s116 = ssub.s32 256, 256
      %117 = vsyncadd [#allocation16], %s116
      %s118 = sshll.u32 [#allocation17], 4
      %s119 = int_to_ptr.vmem [resolvable:$true] %s118
      %124 = dma.hbm_to_vmem [thread:$0]  %s8, 256, %s119, [#allocation16], 64, 64, 4
    $region37: #{tpu_custom_call.1} parent=1 // pred_fallthru
      _
    // Predicated region
    $region38: #{tpu_custom_call.1} parent=1 // pred_check
      _
    $region39: #{tpu_custom_call.1} parent=1 // pred_check_branch
      %126 = sbr.rel (0) target = $region41
    $region40: #{tpu_custom_call.1} parent=1 // pred_region
      %s128 = ssub.s32 16, 16
      %129 = vsyncadd [#allocation19], %s128
      %s131 = sshll.u32 [#allocation18], 4
      %s132 = int_to_ptr.vmem [resolvable:$true] %s131
      %134 = dma.hbm_to_vmem [thread:$0]  %s9, 16, %s132, [#allocation19]
    $region41: #{tpu_custom_call.1} parent=1 // pred_fallthru
      _
    // Predicated region
    $region42: #{tpu_custom_call.1} parent=1 // pred_check
      _
    $region43: #{tpu_custom_call.1} parent=1 // pred_check_branch
      %136 = sbr.rel (0) target = $region45
    $region44: #{tpu_custom_call.1} parent=1 // pred_region
      %s138 = ssub.s32 2560, 2560
      %139 = vsyncadd [#allocation19], %s138
      %s140 = sshll.u32 [#allocation20], 4
      %s141 = int_to_ptr.vmem [resolvable:$true] %s140
      %146 = dma.hbm_to_vmem [thread:$0]  %s10, 2560, %s141, [#allocation19], 128, 128, 8
    $region45: #{tpu_custom_call.1} parent=1 // pred_fallthru
      _
    // Predicated region
    $region46: #{tpu_custom_call.1} parent=1 // pred_check
      _
    $region47: #{tpu_custom_call.1} parent=1 // pred_check_branch
      %148 = sbr.rel (0) target = $region49
    $region48: #{tpu_custom_call.1} parent=1 // pred_region
      %s150 = ssub.s32 16, 16
      %151 = vsyncadd [#allocation22], %s150
      %s153 = sshll.u32 [#allocation21], 4
      %s154 = int_to_ptr.vmem [resolvable:$true] %s153
      %156 = dma.hbm_to_vmem [thread:$0]  %s11, 16, %s154, [#allocation22]
    $region49: #{tpu_custom_call.1} parent=1 // pred_fallthru
      _
    // Predicated region
    $region50: #{tpu_custom_call.1} parent=1 // pred_check
      _
    $region51: #{tpu_custom_call.1} parent=1 // pred_check_branch
      %158 = sbr.rel (0) target = $region53
    $region52: #{tpu_custom_call.1} parent=1 // pred_region
      %159 = dma.done [#allocation4], 32
    $region53: #{tpu_custom_call.1} parent=1 // pred_fallthru
      _
    // Predicated region
    $region54: #{tpu_custom_call.1} parent=1 // pred_check
      _
    $region55: #{tpu_custom_call.1} parent=1 // pred_check_branch
      %161 = sbr.rel (0) target = $region57
    $region56: #{tpu_custom_call.1} parent=1 // pred_region
      %162 = dma.done [#allocation7], 32
    $region57: #{tpu_custom_call.1} parent=1 // pred_fallthru
      _
    // Predicated region
    $region58: #{tpu_custom_call.1} parent=1 // pred_check
      _
    $region59: #{tpu_custom_call.1} parent=1 // pred_check_branch
      %164 = sbr.rel (0) target = $region61
    $region60: #{tpu_custom_call.1} parent=1 // pred_region
      %165 = dma.done [#allocation7], 128
    $region61: #{tpu_custom_call.1} parent=1 // pred_fallthru
      _
    // Predicated region
    $region62: #{tpu_custom_call.1} parent=1 // pred_check
      _
    $region63: #{tpu_custom_call.1} parent=1 // pred_check_branch
      %167 = sbr.rel (0) target = $region65
    $region64: #{tpu_custom_call.1} parent=1 // pred_region
      %168 = dma.done [#allocation10], 192
    $region65: #{tpu_custom_call.1} parent=1 // pred_fallthru
      _
    // Predicated region
    $region66: #{tpu_custom_call.1} parent=1 // pred_check
      _
    $region67: #{tpu_custom_call.1} parent=1 // pred_check_branch
      %170 = sbr.rel (0) target = $region69
    $region68: #{tpu_custom_call.1} parent=1 // pred_region
      %171 = dma.done [#allocation10], 256
    $region69: #{tpu_custom_call.1} parent=1 // pred_fallthru
      _
    // Predicated region
    $region70: #{tpu_custom_call.1} parent=1 // pred_check
      _
    $region71: #{tpu_custom_call.1} parent=1 // pred_check_branch
      %173 = sbr.rel (0) target = $region73
    $region72: #{tpu_custom_call.1} parent=1 // pred_region
      %174 = dma.done [#allocation13], 16
    $region73: #{tpu_custom_call.1} parent=1 // pred_fallthru
      _
    // Predicated region
    $region74: #{tpu_custom_call.1} parent=1 // pred_check
      _
    $region75: #{tpu_custom_call.1} parent=1 // pred_check_branch
      %176 = sbr.rel (0) target = $region77
    $region76: #{tpu_custom_call.1} parent=1 // pred_region
      %177 = dma.done [#allocation13], 256
    $region77: #{tpu_custom_call.1} parent=1 // pred_fallthru
      _
    // Predicated region
    $region78: #{tpu_custom_call.1} parent=1 // pred_check
      _
    $region79: #{tpu_custom_call.1} parent=1 // pred_check_branch
      %179 = sbr.rel (0) target = $region81
    $region80: #{tpu_custom_call.1} parent=1 // pred_region
      %180 = dma.done [#allocation16], 16
    $region81: #{tpu_custom_call.1} parent=1 // pred_fallthru
      _
    // Predicated region
    $region82: #{tpu_custom_call.1} parent=1 // pred_check
      _
    $region83: #{tpu_custom_call.1} parent=1 // pred_check_branch
      %182 = sbr.rel (0) target = $region85
    $region84: #{tpu_custom_call.1} parent=1 // pred_region
      %183 = dma.done [#allocation16], 256
    $region85: #{tpu_custom_call.1} parent=1 // pred_fallthru
      _
    // Predicated region
    $region86: #{tpu_custom_call.1} parent=1 // pred_check
      _
    $region87: #{tpu_custom_call.1} parent=1 // pred_check_branch
      %185 = sbr.rel (0) target = $region89
    $region88: #{tpu_custom_call.1} parent=1 // pred_region
      %186 = dma.done [#allocation19], 16
    $region89: #{tpu_custom_call.1} parent=1 // pred_fallthru
      _
    // Predicated region
    $region90: #{tpu_custom_call.1} parent=1 // pred_check
      _
    $region91: #{tpu_custom_call.1} parent=1 // pred_check_branch
      %188 = sbr.rel (0) target = $region93
    $region92: #{tpu_custom_call.1} parent=1 // pred_region
      %189 = dma.done [#allocation19], 2560
    $region93: #{tpu_custom_call.1} parent=1 // pred_fallthru
      _
    // Predicated region
    $region94: #{tpu_custom_call.1} parent=1 // pred_check
      _
    $region95: #{tpu_custom_call.1} parent=1 // pred_check_branch
      %191 = sbr.rel (0) target = $region97
    $region96: #{tpu_custom_call.1} parent=1 // pred_region
      %192 = dma.done [#allocation22], 16
    $region97: #{tpu_custom_call.1} parent=1 // pred_fallthru
      _
    %v194 = vlaneseq
    %v195 = vshrl.u32 %v194, 7
    %v196 = vadd.s32 %v195, 8
    %v197 = vadd.s32 %v195, 16
    %v198 = vadd.s32 %v195, 24
    %v199 = vlaneseq
    %v200 = vand.u32 %v199, 127
    %v201 = vmul.u32 %v200, 4
    %vm202 = vcmp.ge.s32.totalorder %v195, %v201
    %vm203 = vcmp.ge.s32.totalorder %v196, %v201
    %vm204 = vcmp.ge.s32.totalorder %v197, %v201
    %vm205 = vcmp.ge.s32.totalorder %v198, %v201
    %v206 = vadd.s32 %v200, 1
    %v207 = vmul.u32 %v206, 4
    %vm208 = vcmp.lt.s32.totalorder %v195, %v207
    %vm209 = vcmp.lt.s32.totalorder %v196, %v207
    %vm210 = vcmp.lt.s32.totalorder %v197, %v207
    %vm211 = vcmp.lt.s32.totalorder %v198, %v207
    %vm212 = vmand %vm202, %vm208
    %vm213 = vmand %vm203, %vm209
    %vm214 = vmand %vm204, %vm210
    %vm215 = vmand %vm205, %vm211
    %v216 = vsel %vm212, 1, 0
    %v217 = vsel %vm213, 1, 0
    %v218 = vsel %vm214, 1, 0
    %v219 = vsel %vm215, 1, 0
    %v220 = vcvt.s32.f32 %v216
    %v221 = vcvt.s32.f32 %v217
    %v222 = vcvt.s32.f32 %v218
    %v223 = vcvt.s32.f32 %v219
    %v224 = vmul.u32 %v195, 4
    %vm225 = vcmp.ge.s32.totalorder %v200, %v224
    %v226 = vadd.s32 %v195, 1
    %v227 = vmul.u32 %v226, 4
    %vm228 = vcmp.lt.s32.totalorder %v200, %v227
    %vm229 = vmand %vm225, %vm228
    %v230 = vsel %vm229, 1, 0
    %v231 = vcvt.s32.f32 %v230
    %v232 = vld [vmem:[#allocation3] sm:$0x3]
    %v233 = vld [vmem:[#allocation6] sm:$0x3]
    %v234 = vld [vmem:[#allocation8] sm:$0xf]
    %v235 = vld [vmem:[#allocation8 + $0x4] sm:$0xf]
    %v236 = vld [vmem:[#allocation9] sm:$0xf]
    %v237 = vld [vmem:[#allocation9 + $0x4] sm:$0xf]
    %v238 = vld [vmem:[#allocation9 + $0x8] sm:$0xf]
    %v239 = vld [vmem:[#allocation11] sm:$0xf]
    %v240 = vld [vmem:[#allocation11 + $0x4] sm:$0xf]
    %v241 = vld [vmem:[#allocation11 + $0x8] sm:$0xf]
    %v242 = vld [vmem:[#allocation11 + $0xc] sm:$0xf]
    %v243 = vld [vmem:[#allocation14] sm:$0xf]
    %v244 = vld [vmem:[#allocation14 + $0x4] sm:$0xf]
    %v245 = vld [vmem:[#allocation14 + $0x8] sm:$0xf]
    %v246 = vld [vmem:[#allocation14 + $0xc] sm:$0xf]
    %v247 = vld [vmem:[#allocation17] sm:$0xf]
    %v248 = vld [vmem:[#allocation17 + $0x4] sm:$0xf]
    %v249 = vld [vmem:[#allocation17 + $0x8] sm:$0xf]
    %v250 = vld [vmem:[#allocation17 + $0xc] sm:$0xf]
    %v251 = vld [vmem:[#allocation12] sm:$0x1]
    %v252 = vld [vmem:[#allocation15] sm:$0x1]
    %v253 = vld [vmem:[#allocation18] sm:$0x1]
    %v254 = vpack.c.bf16 %v232, %v232
    %v256 = vlaneseq
    %v257 = vshrl.u32 %v256, 7
    %v258 = vsub.s32 0, %v257
    %v259 = vrot.slane %v251, %v258
    %v265 = vunpack.c.l.b16 %v239
    %v266 = vunpack.c.l.b16 %v240
    %v267 = vunpack.c.l.b16 %v241
    %v268 = vunpack.c.l.b16 %v242
    %v269 = vpack.c.b16 %v266, %v265
    %v270 = vpack.c.b16 %v268, %v267
    %vm273 = vcmask 261120
    %v275 = vsel %vm273, %v254, 0
    %277 = vmatprep.subr.bf16.mxu0 0
    %278 = vmatpush1.bf16.msra.mxu0 %v269
    %279 = vmatprep.subr.bf16.mxu0 0
    %280 = vmatpush1.bf16.msra.mxu0 %v270
    %281 = vmatprep.subr.bf16.mxu0 0
    %282 = vmatpush1.bf16.msra.mxu0 0
    %283 = vmatprep.subr.bf16.mxu0 0
    %284 = vmatpush1.bf16.msra.mxu0 0
    %285 = vmatprep.subr.bf16.mxu0 0
    %286 = vmatpush1.bf16.msra.mxu0 0
    %287 = vmatprep.subr.bf16.mxu0 0
    %288 = vmatpush1.bf16.msra.mxu0 0
    %289 = vmatprep.subr.bf16.mxu0 0
    %290 = vmatpush1.bf16.msra.mxu0 0
    %291 = vmatprep.subr.bf16.mxu0 0
    %292 = vmatpush1.bf16.msra.mxu0 0
    %293 = vmatprep.subr.bf16.mxu0 0
    %294 = vmatpush1.bf16.msra.mxu0 0
    %295 = vmatprep.subr.bf16.mxu0 0
    %296 = vmatpush1.bf16.msra.mxu0 0
    %297 = vmatprep.subr.bf16.mxu0 0
    %298 = vmatpush1.bf16.msra.mxu0 0
    %299 = vmatprep.subr.bf16.mxu0 0
    %300 = vmatpush1.bf16.msra.mxu0 0
    %301 = vmatprep.subr.bf16.mxu0 0
    %302 = vmatpush1.bf16.msra.mxu0 0
    %303 = vmatprep.subr.bf16.mxu0 0
    %304 = vmatpush1.bf16.msra.mxu0 0
    %305 = vmatprep.subr.bf16.mxu0 0
    %306 = vmatpush1.bf16.msra.mxu0 0
    %307 = vmatprep.subr.bf16.mxu0 0
    %308 = vmatpush1.bf16.msra.mxu0 0
    %309 = vmatprep.mubr.bf16.mxu0 0
    %310 = vmatmul.mubr.bf16.gmra.mrb[0].mxu0 %v275
    %v311 = vpop.f32.mrb[0].mxu0
    %v312 = vadd.f32 %v259, %v311
    %v313 = vpop.f32.mrb[0].mxu0
    %v314 = vpop.f32.mrb[0].mxu0
    %v315 = vpop.f32.mrb[0].mxu0
    %316 = vdwg.mxu0
    %v317 = vpack.c.bf16 %v233, %v233
    %v319 = vsel %vm273, %v317, 0
    %321 = vmatprep.subr.bf16.mxu0 0
    %322 = vmatpush1.bf16.msra.mxu0 %v269
    %323 = vmatprep.subr.bf16.mxu0 0
    %324 = vmatpush1.bf16.msra.mxu0 %v270
    %325 = vmatprep.subr.bf16.mxu0 0
    %326 = vmatpush1.bf16.msra.mxu0 0
    %327 = vmatprep.subr.bf16.mxu0 0
    %328 = vmatpush1.bf16.msra.mxu0 0
    %329 = vmatprep.subr.bf16.mxu0 0
    %330 = vmatpush1.bf16.msra.mxu0 0
    %331 = vmatprep.subr.bf16.mxu0 0
    %332 = vmatpush1.bf16.msra.mxu0 0
    %333 = vmatprep.subr.bf16.mxu0 0
    %334 = vmatpush1.bf16.msra.mxu0 0
    %335 = vmatprep.subr.bf16.mxu0 0
    %336 = vmatpush1.bf16.msra.mxu0 0
    %337 = vmatprep.subr.bf16.mxu0 0
    %338 = vmatpush1.bf16.msra.mxu0 0
    %339 = vmatprep.subr.bf16.mxu0 0
    %340 = vmatpush1.bf16.msra.mxu0 0
    %341 = vmatprep.subr.bf16.mxu0 0
    %342 = vmatpush1.bf16.msra.mxu0 0
    %343 = vmatprep.subr.bf16.mxu0 0
    %344 = vmatpush1.bf16.msra.mxu0 0
    %345 = vmatprep.subr.bf16.mxu0 0
    %346 = vmatpush1.bf16.msra.mxu0 0
    %347 = vmatprep.subr.bf16.mxu0 0
    %348 = vmatpush1.bf16.msra.mxu0 0
    %349 = vmatprep.subr.bf16.mxu0 0
    %350 = vmatpush1.bf16.msra.mxu0 0
    %351 = vmatprep.subr.bf16.mxu0 0
    %352 = vmatpush1.bf16.msra.mxu0 0
    %353 = vmatprep.mubr.bf16.mxu0 0
    %354 = vmatmul.mubr.bf16.gmra.mrb[0].mxu0 %v319
    %v355 = vpop.f32.mrb[0].mxu0
    %v356 = vadd.f32 %v259, %v355
    %v357 = vpop.f32.mrb[0].mxu0
    %v358 = vpop.f32.mrb[0].mxu0
    %v359 = vpop.f32.mrb[0].mxu0
    %360 = vdwg.mxu0
    %v362 = vlaneseq
    %v363 = vshrl.u32 %v362, 7
    %v364 = vsub.s32 0, %v363
    %v365 = vrot.slane %v252, %v364
    %v369 = vunpack.c.l.b16 %v234
    %v370 = vunpack.c.l.b16 %v235
    %v371 = vpack.c.b16 %v370, %v369
    %v376 = vunpack.c.l.b16 %v243
    %v377 = vunpack.c.l.b16 %v244
    %v378 = vunpack.c.l.b16 %v245
    %v379 = vunpack.c.l.b16 %v246
    %v380 = vpack.c.b16 %v377, %v376
    %v381 = vpack.c.b16 %v379, %v378
    %v385 = vsel %vm273, %v371, 0
    %387 = vmatprep.subr.bf16.mxu0 0
    %388 = vmatpush1.bf16.msra.mxu0 %v380
    %389 = vmatprep.subr.bf16.mxu0 0
    %390 = vmatpush1.bf16.msra.mxu0 %v381
    %391 = vmatprep.subr.bf16.mxu0 0
    %392 = vmatpush1.bf16.msra.mxu0 0
    %393 = vmatprep.subr.bf16.mxu0 0
    %394 = vmatpush1.bf16.msra.mxu0 0
    %395 = vmatprep.subr.bf16.mxu0 0
    %396 = vmatpush1.bf16.msra.mxu0 0
    %397 = vmatprep.subr.bf16.mxu0 0
    %398 = vmatpush1.bf16.msra.mxu0 0
    %399 = vmatprep.subr.bf16.mxu0 0
    %400 = vmatpush1.bf16.msra.mxu0 0
    %401 = vmatprep.subr.bf16.mxu0 0
    %402 = vmatpush1.bf16.msra.mxu0 0
    %403 = vmatprep.subr.bf16.mxu0 0
    %404 = vmatpush1.bf16.msra.mxu0 0
    %405 = vmatprep.subr.bf16.mxu0 0
    %406 = vmatpush1.bf16.msra.mxu0 0
    %407 = vmatprep.subr.bf16.mxu0 0
    %408 = vmatpush1.bf16.msra.mxu0 0
    %409 = vmatprep.subr.bf16.mxu0 0
    %410 = vmatpush1.bf16.msra.mxu0 0
    %411 = vmatprep.subr.bf16.mxu0 0
    %412 = vmatpush1.bf16.msra.mxu0 0
    %413 = vmatprep.subr.bf16.mxu0 0
    %414 = vmatpush1.bf16.msra.mxu0 0
    %415 = vmatprep.subr.bf16.mxu0 0
    %416 = vmatpush1.bf16.msra.mxu0 0
    %417 = vmatprep.subr.bf16.mxu0 0
    %418 = vmatpush1.bf16.msra.mxu0 0
    %419 = vmatprep.mubr.bf16.mxu0 0
    %420 = vmatmul.mubr.bf16.gmra.mrb[0].mxu0 %v385
    %v421 = vpop.f32.mrb[0].mxu0
    %v422 = vadd.f32 %v365, %v421
    %v423 = vpop.f32.mrb[0].mxu0
    %v424 = vpop.f32.mrb[0].mxu0
    %v425 = vadd.f32 %v365, %v424
    %v426 = vpop.f32.mrb[0].mxu0
    %427 = vdwg.mxu0
    %v431 = vunpack.c.l.b16 %v236
    %v432 = vunpack.c.l.b16 %v237
    %v433 = vunpack.c.l.b16 %v238
    %v434 = vpack.c.b16 %v432, %v431
    %v435 = vpack.c.b16 %v433, %v433
    %v437 = vsel %vm273, %v434, 0
    %v440 = vsel %vm273, %v435, 0
    %442 = vmatprep.subr.bf16.mxu0 0
    %443 = vmatpush1.bf16.msra.mxu0 %v380
    %444 = vmatprep.subr.bf16.mxu0 0
    %445 = vmatpush1.bf16.msra.mxu0 %v381
    %446 = vmatprep.subr.bf16.mxu0 0
    %447 = vmatpush1.bf16.msra.mxu0 0
    %448 = vmatprep.subr.bf16.mxu0 0
    %449 = vmatpush1.bf16.msra.mxu0 0
    %450 = vmatprep.subr.bf16.mxu0 0
    %451 = vmatpush1.bf16.msra.mxu0 0
    %452 = vmatprep.subr.bf16.mxu0 0
    %453 = vmatpush1.bf16.msra.mxu0 0
    %454 = vmatprep.subr.bf16.mxu0 0
    %455 = vmatpush1.bf16.msra.mxu0 0
    %456 = vmatprep.subr.bf16.mxu0 0
    %457 = vmatpush1.bf16.msra.mxu0 0
    %458 = vmatprep.subr.bf16.mxu0 0
    %459 = vmatpush1.bf16.msra.mxu0 0
    %460 = vmatprep.subr.bf16.mxu0 0
    %461 = vmatpush1.bf16.msra.mxu0 0
    %462 = vmatprep.subr.bf16.mxu0 0
    %463 = vmatpush1.bf16.msra.mxu0 0
    %464 = vmatprep.subr.bf16.mxu0 0
    %465 = vmatpush1.bf16.msra.mxu0 0
    %466 = vmatprep.subr.bf16.mxu0 0
    %467 = vmatpush1.bf16.msra.mxu0 0
    %468 = vmatprep.subr.bf16.mxu0 0
    %469 = vmatpush1.bf16.msra.mxu0 0
    %470 = vmatprep.subr.bf16.mxu0 0
    %471 = vmatpush1.bf16.msra.mxu0 0
    %472 = vmatprep.subr.bf16.mxu0 0
    %473 = vmatpush1.bf16.msra.mxu0 0
    %474 = vmatprep.mubr.bf16.mxu0 0
    %475 = vmatmul.mubr.bf16.gmra.mrb[0].mxu0 %v437
    %v476 = vpop.f32.mrb[0].mxu0
    %v477 = vadd.f32 %v365, %v476
    %v478 = vpop.f32.mrb[0].mxu0
    %v479 = vpop.f32.mrb[0].mxu0
    %v480 = vadd.f32 %v365, %v479
    %v481 = vpop.f32.mrb[0].mxu0
    %482 = vmatprep.mubr.bf16.mxu0 0
    %483 = vmatmul.mubr.bf16.gmra.mrb[0].mxu0 %v440
    %v484 = vpop.f32.mrb[0].mxu0
    %v485 = vadd.f32 %v365, %v484
    %v486 = vpop.f32.mrb[0].mxu0
    %v487 = vpop.f32.mrb[0].mxu0
    %v488 = vpop.f32.mrb[0].mxu0
    %489 = vdwg.mxu0
    %v490 = vlaneseq
    %v491 = vshrl.u32 %v490, 7
    %v492 = vsub.s32 0, %v491
    %v493 = vrot.slane %v312, %v492
    %v494 = vmul.f32 %v493, %v477
    %v495 = vmul.f32 %v493, %v480
    %v497 = vsel %vm273, %v494, 0
    %v500 = vsel %vm273, %v495, 0
    %502 = vmatprep.subr.mxu0 0.0
    %503 = vmatpush1.msra.mxu0 %v220
    %504 = vmatprep.subr.mxu0 0.0
    %505 = vmatpush1.msra.mxu0 %v221
    %506 = vmatprep.subr.mxu0 0.0
    %507 = vmatpush1.msra.mxu0 %v222
    %508 = vmatprep.subr.mxu0 0.0
    %509 = vmatpush1.msra.mxu0 %v223
    %510 = vmatprep.subr.mxu0 0.0
    %511 = vmatpush1.msra.mxu0 0.0
    %512 = vmatprep.subr.mxu0 0.0
    %513 = vmatpush1.msra.mxu0 0.0
    %514 = vmatprep.subr.mxu0 0.0
    %515 = vmatpush1.msra.mxu0 0.0
    %516 = vmatprep.subr.mxu0 0.0
    %517 = vmatpush1.msra.mxu0 0.0
    %518 = vmatprep.subr.mxu0 0.0
    %519 = vmatpush1.msra.mxu0 0.0
    %520 = vmatprep.subr.mxu0 0.0
    %521 = vmatpush1.msra.mxu0 0.0
    %522 = vmatprep.subr.mxu0 0.0
    %523 = vmatpush1.msra.mxu0 0.0
    %524 = vmatprep.subr.mxu0 0.0
    %525 = vmatpush1.msra.mxu0 0.0
    %526 = vmatprep.subr.mxu0 0.0
    %527 = vmatpush1.msra.mxu0 0.0
    %528 = vmatprep.subr.mxu0 0.0
    %529 = vmatpush1.msra.mxu0 0.0
    %530 = vmatprep.subr.mxu0 0.0
    %531 = vmatpush1.msra.mxu0 0.0
    %532 = vmatprep.subr.mxu0 0.0
    %533 = vmatpush1.msra.mxu0 0.0
    %534 = vmatprep.subr.mxu0 0.0
    %535 = vmatpush1.msra.mxu0 0.0
    %536 = vmatprep.subr.mxu0 0.0
    %537 = vmatpush1.msra.mxu0 0.0
    %538 = vmatprep.subr.mxu0 0.0
    %539 = vmatpush1.msra.mxu0 0.0
    %540 = vmatprep.subr.mxu0 0.0
    %541 = vmatpush1.msra.mxu0 0.0
    %542 = vmatprep.subr.mxu0 0.0
    %543 = vmatpush1.msra.mxu0 0.0
    %544 = vmatprep.subr.mxu0 0.0
    %545 = vmatpush1.msra.mxu0 0.0
    %546 = vmatprep.subr.mxu0 0.0
    %547 = vmatpush1.msra.mxu0 0.0
    %548 = vmatprep.subr.mxu0 0.0
    %549 = vmatpush1.msra.mxu0 0.0
    %550 = vmatprep.subr.mxu0 0.0
    %551 = vmatpush1.msra.mxu0 0.0
    %552 = vmatprep.subr.mxu0 0.0
    %553 = vmatpush1.msra.mxu0 0.0
    %554 = vmatprep.subr.mxu0 0.0
    %555 = vmatpush1.msra.mxu0 0.0
    %556 = vmatprep.subr.mxu0 0.0
    %557 = vmatpush1.msra.mxu0 0.0
    %558 = vmatprep.subr.mxu0 0.0
    %559 = vmatpush1.msra.mxu0 0.0
    %560 = vmatprep.subr.mxu0 0.0
    %561 = vmatpush1.msra.mxu0 0.0
    %562 = vmatprep.subr.mxu0 0.0
    %563 = vmatpush1.msra.mxu0 0.0
    %564 = vmatprep.subr.mxu0 0.0
    %565 = vmatpush1.msra.mxu0 0.0
    %566 = vmatprep.mubr.f32.mxu0 0.0
    %567 = vmatmul.mubr.f32.gmra.mrb[0].mxu0 %v497
    %v568 = vpop.f32.mrb[0].mxu0
    %v569 = vadd.f32 0.0, %v568
    %v570 = vpop.f32.mrb[0].mxu0
    %571 = vmatprep.mubr.f32.mxu0 0.0
    %572 = vmatmul.mubr.f32.gmra.mrb[0].mxu0 %v500
    %v573 = vpop.f32.mrb[0].mxu0
    %v574 = vadd.f32 0.0, %v573
    %v575 = vpop.f32.mrb[0].mxu0
    %576 = vdwg.mxu0
    %vm577 = vcmask 64512
    %v578 = vsel %vm577, %v569, -inf
    %vm579 = vcmask 60416
    %v580 = vsel %vm579, %v574, -inf
    %v581 = vmax.f32 %v578, %v580
    %v582 = vrot.slane %v581, 4
    %v583 = vmax.f32 %v581, %v582
    %v584 = vrot.slane %v583, 2
    %v585 = vmax.f32 %v583, %v584
    %v586 = vrot.slane %v585, 1
    %v587 = vmax.f32 %v585, %v586
    %v588 = vsub.f32 %v569, %v587
    %v589 = vsub.f32 %v574, %v587
    %v590 = vmul.f32 %v588, 1.442695
    %v591 = vpow.pop %v590
    %v592 = vmul.f32 %v589, 1.442695
    %v593 = vpow.pop %v592
    %v594 = vsel %vm577, %v591, 0.0
    %v595 = vsel %vm579, %v593, 0.0
    %v596 = vadd.f32 %v594, %v595
    %v597 = vrot.slane %v596, 4
    %v598 = vadd.f32 %v596, %v597
    %v599 = vrot.slane %v598, 2
    %v600 = vadd.f32 %v598, %v599
    %v601 = vrot.slane %v600, 1
    %v602 = vadd.f32 %v600, %v601
    %v604 = vsel %vm577, %v591, 0
    %v607 = vsel %vm577, %v593, 0
    %609 = vmatprep.subr.mxu0 0.0
    %610 = vmatpush1.msra.mxu0 %v231
    %611 = vmatprep.subr.mxu0 0.0
    %612 = vmatpush1.msra.mxu0 0.0
    %613 = vmatprep.subr.mxu0 0.0
    %614 = vmatpush1.msra.mxu0 0.0
    %615 = vmatprep.subr.mxu0 0.0
    %616 = vmatpush1.msra.mxu0 0.0
    %617 = vmatprep.subr.mxu0 0.0
    %618 = vmatpush1.msra.mxu0 0.0
    %619 = vmatprep.subr.mxu0 0.0
    %620 = vmatpush1.msra.mxu0 0.0
    %621 = vmatprep.subr.mxu0 0.0
    %622 = vmatpush1.msra.mxu0 0.0
    %623 = vmatprep.subr.mxu0 0.0
    %624 = vmatpush1.msra.mxu0 0.0
    %625 = vmatprep.subr.mxu0 0.0
    %626 = vmatpush1.msra.mxu0 0.0
    %627 = vmatprep.subr.mxu0 0.0
    %628 = vmatpush1.msra.mxu0 0.0
    %629 = vmatprep.subr.mxu0 0.0
    %630 = vmatpush1.msra.mxu0 0.0
    %631 = vmatprep.subr.mxu0 0.0
    %632 = vmatpush1.msra.mxu0 0.0
    %633 = vmatprep.subr.mxu0 0.0
    %634 = vmatpush1.msra.mxu0 0.0
    %635 = vmatprep.subr.mxu0 0.0
    %636 = vmatpush1.msra.mxu0 0.0
    %637 = vmatprep.subr.mxu0 0.0
    %638 = vmatpush1.msra.mxu0 0.0
    %639 = vmatprep.subr.mxu0 0.0
    %640 = vmatpush1.msra.mxu0 0.0
    %641 = vmatprep.subr.mxu0 0.0
    %642 = vmatpush1.msra.mxu0 0.0
    %643 = vmatprep.subr.mxu0 0.0
    %644 = vmatpush1.msra.mxu0 0.0
    %645 = vmatprep.subr.mxu0 0.0
    %646 = vmatpush1.msra.mxu0 0.0
    %647 = vmatprep.subr.mxu0 0.0
    %648 = vmatpush1.msra.mxu0 0.0
    %649 = vmatprep.subr.mxu0 0.0
    %650 = vmatpush1.msra.mxu0 0.0
    %651 = vmatprep.subr.mxu0 0.0
    %652 = vmatpush1.msra.mxu0 0.0
    %653 = vmatprep.subr.mxu0 0.0
    %654 = vmatpush1.msra.mxu0 0.0
    %655 = vmatprep.subr.mxu0 0.0
    %656 = vmatpush1.msra.mxu0 0.0
    %657 = vmatprep.subr.mxu0 0.0
    %658 = vmatpush1.msra.mxu0 0.0
    %659 = vmatprep.subr.mxu0 0.0
    %660 = vmatpush1.msra.mxu0 0.0
    %661 = vmatprep.subr.mxu0 0.0
    %662 = vmatpush1.msra.mxu0 0.0
    %663 = vmatprep.subr.mxu0 0.0
    %664 = vmatpush1.msra.mxu0 0.0
    %665 = vmatprep.subr.mxu0 0.0
    %666 = vmatpush1.msra.mxu0 0.0
    %667 = vmatprep.subr.mxu0 0.0
    %668 = vmatpush1.msra.mxu0 0.0
    %669 = vmatprep.subr.mxu0 0.0
    %670 = vmatpush1.msra.mxu0 0.0
    %671 = vmatprep.subr.mxu0 0.0
    %672 = vmatpush1.msra.mxu0 0.0
    %673 = vmatprep.mubr.f32.mxu0 0.0
    %674 = vmatmul.mubr.f32.gmra.mrb[0].mxu0 %v604
    %v675 = vpop.f32.mrb[0].mxu0
    %v676 = vadd.f32 0.0, %v675
    %v677 = vpop.f32.mrb[0].mxu0
    %678 = vmatprep.mubr.f32.mxu0 0.0
    %679 = vmatmul.mubr.f32.gmra.mrb[0].mxu0 %v607
    %v680 = vpop.f32.mrb[0].mxu0
    %v681 = vadd.f32 0.0, %v680
    %v682 = vpop.f32.mrb[0].mxu0
    %683 = vdwg.mxu0
    %686 = vrot.lane.b32.xlu0 %v477, 96
    %v687 = vpop.permute.xlu0 %686
    %688 = vrot.lane.b32.xlu0 %v480, 96
    %v689 = vpop.permute.xlu0 %688
    %v692 = vmul.f32 %v676, %v687
    %v693 = vmul.f32 %v681, %v689
    %vm694 = vcmask 97280
    %v696 = vsel %vm694, 1.0, 0
    %vm698 = vcmask 1043456
    %v700 = vsel %vm698, %v693, 0
    %702 = vmatprep.subr.mxu0 0.0
    %703 = vmatpush1.msra.mxu0 %v692
    %704 = vmatprep.subr.mxu0 0.0
    %705 = vmatpush1.msra.mxu0 %v700
    %706 = vmatprep.subr.mxu0 0.0
    %707 = vmatpush1.msra.mxu0 0.0
    %708 = vmatprep.subr.mxu0 0.0
    %709 = vmatpush1.msra.mxu0 0.0
    %710 = vmatprep.subr.mxu0 0.0
    %711 = vmatpush1.msra.mxu0 0.0
    %712 = vmatprep.subr.mxu0 0.0
    %713 = vmatpush1.msra.mxu0 0.0
    %714 = vmatprep.subr.mxu0 0.0
    %715 = vmatpush1.msra.mxu0 0.0
    %716 = vmatprep.subr.mxu0 0.0
    %717 = vmatpush1.msra.mxu0 0.0
    %718 = vmatprep.subr.mxu0 0.0
    %719 = vmatpush1.msra.mxu0 0.0
    %720 = vmatprep.subr.mxu0 0.0
    %721 = vmatpush1.msra.mxu0 0.0
    %722 = vmatprep.subr.mxu0 0.0
    %723 = vmatpush1.msra.mxu0 0.0
    %724 = vmatprep.subr.mxu0 0.0
    %725 = vmatpush1.msra.mxu0 0.0
    %726 = vmatprep.subr.mxu0 0.0
    %727 = vmatpush1.msra.mxu0 0.0
    %728 = vmatprep.subr.mxu0 0.0
    %729 = vmatpush1.msra.mxu0 0.0
    %730 = vmatprep.subr.mxu0 0.0
    %731 = vmatpush1.msra.mxu0 0.0
    %732 = vmatprep.subr.mxu0 0.0
    %733 = vmatpush1.msra.mxu0 0.0
    %734 = vmatprep.subr.mxu0 0.0
    %735 = vmatpush1.msra.mxu0 0.0
    %736 = vmatprep.subr.mxu0 0.0
    %737 = vmatpush1.msra.mxu0 0.0
    %738 = vmatprep.subr.mxu0 0.0
    %739 = vmatpush1.msra.mxu0 0.0
    %740 = vmatprep.subr.mxu0 0.0
    %741 = vmatpush1.msra.mxu0 0.0
    %742 = vmatprep.subr.mxu0 0.0
    %743 = vmatpush1.msra.mxu0 0.0
    %744 = vmatprep.subr.mxu0 0.0
    %745 = vmatpush1.msra.mxu0 0.0
    %746 = vmatprep.subr.mxu0 0.0
    %747 = vmatpush1.msra.mxu0 0.0
    %748 = vmatprep.subr.mxu0 0.0
    %749 = vmatpush1.msra.mxu0 0.0
    %750 = vmatprep.subr.mxu0 0.0
    %751 = vmatpush1.msra.mxu0 0.0
    %752 = vmatprep.subr.mxu0 0.0
    %753 = vmatpush1.msra.mxu0 0.0
    %754 = vmatprep.subr.mxu0 0.0
    %755 = vmatpush1.msra.mxu0 0.0
    %756 = vmatprep.subr.mxu0 0.0
    %757 = vmatpush1.msra.mxu0 0.0
    %758 = vmatprep.subr.mxu0 0.0
    %759 = vmatpush1.msra.mxu0 0.0
    %760 = vmatprep.subr.mxu0 0.0
    %761 = vmatpush1.msra.mxu0 0.0
    %762 = vmatprep.subr.mxu0 0.0
    %763 = vmatpush1.msra.mxu0 0.0
    %764 = vmatprep.subr.mxu0 0.0
    %765 = vmatpush1.msra.mxu0 0.0
    %766 = vmatprep.mubr.f32.mxu0 0.0
    %767 = vmatmul.mubr.f32.gmra.mrb[0].mxu0 %v696
    %v768 = vpop.f32.mrb[0].mxu0
    %v769 = vadd.f32 0.0, %v768
    %v770 = vpop.f32.mrb[0].mxu0
    %771 = vdwg.mxu0
    %v772 = vrcp.pop %v602
    %v774 = vsel %vm577, %v772, 0
    %776 = vmatprep.subr.mxu0 0.0
    %777 = vmatpush1.msra.mxu0 %v231
    %778 = vmatprep.subr.mxu0 0.0
    %779 = vmatpush1.msra.mxu0 0.0
    %780 = vmatprep.subr.mxu0 0.0
    %781 = vmatpush1.msra.mxu0 0.0
    %782 = vmatprep.subr.mxu0 0.0
    %783 = vmatpush1.msra.mxu0 0.0
    %784 = vmatprep.subr.mxu0 0.0
    %785 = vmatpush1.msra.mxu0 0.0
    %786 = vmatprep.subr.mxu0 0.0
    %787 = vmatpush1.msra.mxu0 0.0
    %788 = vmatprep.subr.mxu0 0.0
    %789 = vmatpush1.msra.mxu0 0.0
    %790 = vmatprep.subr.mxu0 0.0
    %791 = vmatpush1.msra.mxu0 0.0
    %792 = vmatprep.subr.mxu0 0.0
    %793 = vmatpush1.msra.mxu0 0.0
    %794 = vmatprep.subr.mxu0 0.0
    %795 = vmatpush1.msra.mxu0 0.0
    %796 = vmatprep.subr.mxu0 0.0
    %797 = vmatpush1.msra.mxu0 0.0
    %798 = vmatprep.subr.mxu0 0.0
    %799 = vmatpush1.msra.mxu0 0.0
    %800 = vmatprep.subr.mxu0 0.0
    %801 = vmatpush1.msra.mxu0 0.0
    %802 = vmatprep.subr.mxu0 0.0
    %803 = vmatpush1.msra.mxu0 0.0
    %804 = vmatprep.subr.mxu0 0.0
    %805 = vmatpush1.msra.mxu0 0.0
    %806 = vmatprep.subr.mxu0 0.0
    %807 = vmatpush1.msra.mxu0 0.0
    %808 = vmatprep.subr.mxu0 0.0
    %809 = vmatpush1.msra.mxu0 0.0
    %810 = vmatprep.subr.mxu0 0.0
    %811 = vmatpush1.msra.mxu0 0.0
    %812 = vmatprep.subr.mxu0 0.0
    %813 = vmatpush1.msra.mxu0 0.0
    %814 = vmatprep.subr.mxu0 0.0
    %815 = vmatpush1.msra.mxu0 0.0
    %816 = vmatprep.subr.mxu0 0.0
    %817 = vmatpush1.msra.mxu0 0.0
    %818 = vmatprep.subr.mxu0 0.0
    %819 = vmatpush1.msra.mxu0 0.0
    %820 = vmatprep.subr.mxu0 0.0
    %821 = vmatpush1.msra.mxu0 0.0
    %822 = vmatprep.subr.mxu0 0.0
    %823 = vmatpush1.msra.mxu0 0.0
    %824 = vmatprep.subr.mxu0 0.0
    %825 = vmatpush1.msra.mxu0 0.0
    %826 = vmatprep.subr.mxu0 0.0
    %827 = vmatpush1.msra.mxu0 0.0
    %828 = vmatprep.subr.mxu0 0.0
    %829 = vmatpush1.msra.mxu0 0.0
    %830 = vmatprep.subr.mxu0 0.0
    %831 = vmatpush1.msra.mxu0 0.0
    %832 = vmatprep.subr.mxu0 0.0
    %833 = vmatpush1.msra.mxu0 0.0
    %834 = vmatprep.subr.mxu0 0.0
    %835 = vmatpush1.msra.mxu0 0.0
    %836 = vmatprep.subr.mxu0 0.0
    %837 = vmatpush1.msra.mxu0 0.0
    %838 = vmatprep.subr.mxu0 0.0
    %839 = vmatpush1.msra.mxu0 0.0
    %840 = vmatprep.mubr.f32.mxu0 0.0
    %841 = vmatmul.mubr.f32.gmra.mrb[0].mxu0 %v774
    %v842 = vpop.f32.mrb[0].mxu0
    %v843 = vadd.f32 0.0, %v842
    %v844 = vpop.f32.mrb[0].mxu0
    %845 = vdwg.mxu0
    %v846 = vmul.f32 %v769, %v843
    %v847 = vlaneseq
    %v848 = vshrl.u32 %v847, 7
    %v849 = vsub.s32 0, %v848
    %v850 = vrot.slane %v356, %v849
    %v851 = vmul.f32 %v850, %v422
    %v853 = vsel %vm273, %v851, 0
    %855 = vmatprep.subr.mxu0 0.0
    %856 = vmatpush1.msra.mxu0 %v220
    %857 = vmatprep.subr.mxu0 0.0
    %858 = vmatpush1.msra.mxu0 %v221
    %859 = vmatprep.subr.mxu0 0.0
    %860 = vmatpush1.msra.mxu0 %v222
    %861 = vmatprep.subr.mxu0 0.0
    %862 = vmatpush1.msra.mxu0 %v223
    %863 = vmatprep.subr.mxu0 0.0
    %864 = vmatpush1.msra.mxu0 0.0
    %865 = vmatprep.subr.mxu0 0.0
    %866 = vmatpush1.msra.mxu0 0.0
    %867 = vmatprep.subr.mxu0 0.0
    %868 = vmatpush1.msra.mxu0 0.0
    %869 = vmatprep.subr.mxu0 0.0
    %870 = vmatpush1.msra.mxu0 0.0
    %871 = vmatprep.subr.mxu0 0.0
    %872 = vmatpush1.msra.mxu0 0.0
    %873 = vmatprep.subr.mxu0 0.0
    %874 = vmatpush1.msra.mxu0 0.0
    %875 = vmatprep.subr.mxu0 0.0
    %876 = vmatpush1.msra.mxu0 0.0
    %877 = vmatprep.subr.mxu0 0.0
    %878 = vmatpush1.msra.mxu0 0.0
    %879 = vmatprep.subr.mxu0 0.0
    %880 = vmatpush1.msra.mxu0 0.0
    %881 = vmatprep.subr.mxu0 0.0
    %882 = vmatpush1.msra.mxu0 0.0
    %883 = vmatprep.subr.mxu0 0.0
    %884 = vmatpush1.msra.mxu0 0.0
    %885 = vmatprep.subr.mxu0 0.0
    %886 = vmatpush1.msra.mxu0 0.0
    %887 = vmatprep.subr.mxu0 0.0
    %888 = vmatpush1.msra.mxu0 0.0
    %889 = vmatprep.subr.mxu0 0.0
    %890 = vmatpush1.msra.mxu0 0.0
    %891 = vmatprep.subr.mxu0 0.0
    %892 = vmatpush1.msra.mxu0 0.0
    %893 = vmatprep.subr.mxu0 0.0
    %894 = vmatpush1.msra.mxu0 0.0
    %895 = vmatprep.subr.mxu0 0.0
    %896 = vmatpush1.msra.mxu0 0.0
    %897 = vmatprep.subr.mxu0 0.0
    %898 = vmatpush1.msra.mxu0 0.0
    %899 = vmatprep.subr.mxu0 0.0
    %900 = vmatpush1.msra.mxu0 0.0
    %901 = vmatprep.subr.mxu0 0.0
    %902 = vmatpush1.msra.mxu0 0.0
    %903 = vmatprep.subr.mxu0 0.0
    %904 = vmatpush1.msra.mxu0 0.0
    %905 = vmatprep.subr.mxu0 0.0
    %906 = vmatpush1.msra.mxu0 0.0
    %907 = vmatprep.subr.mxu0 0.0
    %908 = vmatpush1.msra.mxu0 0.0
    %909 = vmatprep.subr.mxu0 0.0
    %910 = vmatpush1.msra.mxu0 0.0
    %911 = vmatprep.subr.mxu0 0.0
    %912 = vmatpush1.msra.mxu0 0.0
    %913 = vmatprep.subr.mxu0 0.0
    %914 = vmatpush1.msra.mxu0 0.0
    %915 = vmatprep.subr.mxu0 0.0
    %916 = vmatpush1.msra.mxu0 0.0
    %917 = vmatprep.subr.mxu0 0.0
    %918 = vmatpush1.msra.mxu0 0.0
    %919 = vmatprep.mubr.f32.mxu0 0.0
    %920 = vmatmul.mubr.f32.gmra.mrb[0].mxu0 %v853
    %v921 = vpop.f32.mrb[0].mxu0
    %v922 = vadd.f32 0.0, %v921
    %v923 = vpop.f32.mrb[0].mxu0
    %924 = vdwg.mxu0
    %v925 = vsel %vm577, %v922, -inf
    %v926 = vrot.slane %v925, 4
    %v927 = vmax.f32 %v925, %v926
    %v928 = vrot.slane %v927, 2
    %v929 = vmax.f32 %v927, %v928
    %v930 = vrot.slane %v929, 1
    %v931 = vmax.f32 %v929, %v930
    %v932 = vsub.f32 %v922, %v931
    %v933 = vmul.f32 %v932, 1.442695
    %v934 = vpow.pop %v933
    %v935 = vsel %vm577, %v934, 0.0
    %v936 = vrot.slane %v935, 4
    %v937 = vadd.f32 %v935, %v936
    %v938 = vrot.slane %v937, 2
    %v939 = vadd.f32 %v937, %v938
    %v940 = vrot.slane %v939, 1
    %v941 = vadd.f32 %v939, %v940
    %v943 = vsel %vm577, %v934, 0
    %945 = vmatprep.subr.mxu0 0.0
    %946 = vmatpush1.msra.mxu0 %v231
    %947 = vmatprep.subr.mxu0 0.0
    %948 = vmatpush1.msra.mxu0 0.0
    %949 = vmatprep.subr.mxu0 0.0
    %950 = vmatpush1.msra.mxu0 0.0
    %951 = vmatprep.subr.mxu0 0.0
    %952 = vmatpush1.msra.mxu0 0.0
    %953 = vmatprep.subr.mxu0 0.0
    %954 = vmatpush1.msra.mxu0 0.0
    %955 = vmatprep.subr.mxu0 0.0
    %956 = vmatpush1.msra.mxu0 0.0
    %957 = vmatprep.subr.mxu0 0.0
    %958 = vmatpush1.msra.mxu0 0.0
    %959 = vmatprep.subr.mxu0 0.0
    %960 = vmatpush1.msra.mxu0 0.0
    %961 = vmatprep.subr.mxu0 0.0
    %962 = vmatpush1.msra.mxu0 0.0
    %963 = vmatprep.subr.mxu0 0.0
    %964 = vmatpush1.msra.mxu0 0.0
    %965 = vmatprep.subr.mxu0 0.0
    %966 = vmatpush1.msra.mxu0 0.0
    %967 = vmatprep.subr.mxu0 0.0
    %968 = vmatpush1.msra.mxu0 0.0
    %969 = vmatprep.subr.mxu0 0.0
    %970 = vmatpush1.msra.mxu0 0.0
    %971 = vmatprep.subr.mxu0 0.0
    %972 = vmatpush1.msra.mxu0 0.0
    %973 = vmatprep.subr.mxu0 0.0
    %974 = vmatpush1.msra.mxu0 0.0
    %975 = vmatprep.subr.mxu0 0.0
    %976 = vmatpush1.msra.mxu0 0.0
    %977 = vmatprep.subr.mxu0 0.0
    %978 = vmatpush1.msra.mxu0 0.0
    %979 = vmatprep.subr.mxu0 0.0
    %980 = vmatpush1.msra.mxu0 0.0
    %981 = vmatprep.subr.mxu0 0.0
    %982 = vmatpush1.msra.mxu0 0.0
    %983 = vmatprep.subr.mxu0 0.0
    %984 = vmatpush1.msra.mxu0 0.0
    %985 = vmatprep.subr.mxu0 0.0
    %986 = vmatpush1.msra.mxu0 0.0
    %987 = vmatprep.subr.mxu0 0.0
    %988 = vmatpush1.msra.mxu0 0.0
    %989 = vmatprep.subr.mxu0 0.0
    %990 = vmatpush1.msra.mxu0 0.0
    %991 = vmatprep.subr.mxu0 0.0
    %992 = vmatpush1.msra.mxu0 0.0
    %993 = vmatprep.subr.mxu0 0.0
    %994 = vmatpush1.msra.mxu0 0.0
    %995 = vmatprep.subr.mxu0 0.0
    %996 = vmatpush1.msra.mxu0 0.0
    %997 = vmatprep.subr.mxu0 0.0
    %998 = vmatpush1.msra.mxu0 0.0
    %999 = vmatprep.subr.mxu0 0.0
    %1000 = vmatpush1.msra.mxu0 0.0
    %1001 = vmatprep.subr.mxu0 0.0
    %1002 = vmatpush1.msra.mxu0 0.0
    %1003 = vmatprep.subr.mxu0 0.0
    %1004 = vmatpush1.msra.mxu0 0.0
    %1005 = vmatprep.subr.mxu0 0.0
    %1006 = vmatpush1.msra.mxu0 0.0
    %1007 = vmatprep.subr.mxu0 0.0
    %1008 = vmatpush1.msra.mxu0 0.0
    %1009 = vmatprep.mubr.f32.mxu0 0.0
    %1010 = vmatmul.mubr.f32.gmra.mrb[0].mxu0 %v943
    %v1011 = vpop.f32.mrb[0].mxu0
    %v1012 = vadd.f32 0.0, %v1011
    %v1013 = vpop.f32.mrb[0].mxu0
    %1014 = vdwg.mxu0
    %1016 = vrot.lane.b32.xlu0 %v422, 96
    %v1017 = vpop.permute.xlu0 %1016
    %v1019 = vmul.f32 %v1012, %v1017
    %v1020 = vsel %vm577, 1.0, 0
    %1022 = vmatprep.subr.mxu0 0.0
    %1023 = vmatpush1.msra.mxu0 %v1019
    %1024 = vmatprep.subr.mxu0 0.0
    %1025 = vmatpush1.msra.mxu0 0.0
    %1026 = vmatprep.subr.mxu0 0.0
    %1027 = vmatpush1.msra.mxu0 0.0
    %1028 = vmatprep.subr.mxu0 0.0
    %1029 = vmatpush1.msra.mxu0 0.0
    %1030 = vmatprep.subr.mxu0 0.0
    %1031 = vmatpush1.msra.mxu0 0.0
    %1032 = vmatprep.subr.mxu0 0.0
    %1033 = vmatpush1.msra.mxu0 0.0
    %1034 = vmatprep.subr.mxu0 0.0
    %1035 = vmatpush1.msra.mxu0 0.0
    %1036 = vmatprep.subr.mxu0 0.0
    %1037 = vmatpush1.msra.mxu0 0.0
    %1038 = vmatprep.subr.mxu0 0.0
    %1039 = vmatpush1.msra.mxu0 0.0
    %1040 = vmatprep.subr.mxu0 0.0
    %1041 = vmatpush1.msra.mxu0 0.0
    %1042 = vmatprep.subr.mxu0 0.0
    %1043 = vmatpush1.msra.mxu0 0.0
    %1044 = vmatprep.subr.mxu0 0.0
    %1045 = vmatpush1.msra.mxu0 0.0
    %1046 = vmatprep.subr.mxu0 0.0
    %1047 = vmatpush1.msra.mxu0 0.0
    %1048 = vmatprep.subr.mxu0 0.0
    %1049 = vmatpush1.msra.mxu0 0.0
    %1050 = vmatprep.subr.mxu0 0.0
    %1051 = vmatpush1.msra.mxu0 0.0
    %1052 = vmatprep.subr.mxu0 0.0
    %1053 = vmatpush1.msra.mxu0 0.0
    %1054 = vmatprep.subr.mxu0 0.0
    %1055 = vmatpush1.msra.mxu0 0.0
    %1056 = vmatprep.subr.mxu0 0.0
    %1057 = vmatpush1.msra.mxu0 0.0
    %1058 = vmatprep.subr.mxu0 0.0
    %1059 = vmatpush1.msra.mxu0 0.0
    %1060 = vmatprep.subr.mxu0 0.0
    %1061 = vmatpush1.msra.mxu0 0.0
    %1062 = vmatprep.subr.mxu0 0.0
    %1063 = vmatpush1.msra.mxu0 0.0
    %1064 = vmatprep.subr.mxu0 0.0
    %1065 = vmatpush1.msra.mxu0 0.0
    %1066 = vmatprep.subr.mxu0 0.0
    %1067 = vmatpush1.msra.mxu0 0.0
    %1068 = vmatprep.subr.mxu0 0.0
    %1069 = vmatpush1.msra.mxu0 0.0
    %1070 = vmatprep.subr.mxu0 0.0
    %1071 = vmatpush1.msra.mxu0 0.0
    %1072 = vmatprep.subr.mxu0 0.0
    %1073 = vmatpush1.msra.mxu0 0.0
    %1074 = vmatprep.subr.mxu0 0.0
    %1075 = vmatpush1.msra.mxu0 0.0
    %1076 = vmatprep.subr.mxu0 0.0
    %1077 = vmatpush1.msra.mxu0 0.0
    %1078 = vmatprep.subr.mxu0 0.0
    %1079 = vmatpush1.msra.mxu0 0.0
    %1080 = vmatprep.subr.mxu0 0.0
    %1081 = vmatpush1.msra.mxu0 0.0
    %1082 = vmatprep.subr.mxu0 0.0
    %1083 = vmatpush1.msra.mxu0 0.0
    %1084 = vmatprep.subr.mxu0 0.0
    %1085 = vmatpush1.msra.mxu0 0.0
    %1086 = vmatprep.mubr.f32.mxu0 0.0
    %1087 = vmatmul.mubr.f32.gmra.mrb[0].mxu0 %v1020
    %v1088 = vpop.f32.mrb[0].mxu0
    %v1089 = vadd.f32 0.0, %v1088
    %v1090 = vpop.f32.mrb[0].mxu0
    %1091 = vdwg.mxu0
    %v1092 = vrcp.pop %v941
    %v1094 = vsel %vm577, %v1092, 0
    %1096 = vmatprep.subr.mxu0 0.0
    %1097 = vmatpush1.msra.mxu0 %v231
    %1098 = vmatprep.subr.mxu0 0.0
    %1099 = vmatpush1.msra.mxu0 0.0
    %1100 = vmatprep.subr.mxu0 0.0
    %1101 = vmatpush1.msra.mxu0 0.0
    %1102 = vmatprep.subr.mxu0 0.0
    %1103 = vmatpush1.msra.mxu0 0.0
    %1104 = vmatprep.subr.mxu0 0.0
    %1105 = vmatpush1.msra.mxu0 0.0
    %1106 = vmatprep.subr.mxu0 0.0
    %1107 = vmatpush1.msra.mxu0 0.0
    %1108 = vmatprep.subr.mxu0 0.0
    %1109 = vmatpush1.msra.mxu0 0.0
    %1110 = vmatprep.subr.mxu0 0.0
    %1111 = vmatpush1.msra.mxu0 0.0
    %1112 = vmatprep.subr.mxu0 0.0
    %1113 = vmatpush1.msra.mxu0 0.0
    %1114 = vmatprep.subr.mxu0 0.0
    %1115 = vmatpush1.msra.mxu0 0.0
    %1116 = vmatprep.subr.mxu0 0.0
    %1117 = vmatpush1.msra.mxu0 0.0
    %1118 = vmatprep.subr.mxu0 0.0
    %1119 = vmatpush1.msra.mxu0 0.0
    %1120 = vmatprep.subr.mxu0 0.0
    %1121 = vmatpush1.msra.mxu0 0.0
    %1122 = vmatprep.subr.mxu0 0.0
    %1123 = vmatpush1.msra.mxu0 0.0
    %1124 = vmatprep.subr.mxu0 0.0
    %1125 = vmatpush1.msra.mxu0 0.0
    %1126 = vmatprep.subr.mxu0 0.0
    %1127 = vmatpush1.msra.mxu0 0.0
    %1128 = vmatprep.subr.mxu0 0.0
    %1129 = vmatpush1.msra.mxu0 0.0
    %1130 = vmatprep.subr.mxu0 0.0
    %1131 = vmatpush1.msra.mxu0 0.0
    %1132 = vmatprep.subr.mxu0 0.0
    %1133 = vmatpush1.msra.mxu0 0.0
    %1134 = vmatprep.subr.mxu0 0.0
    %1135 = vmatpush1.msra.mxu0 0.0
    %1136 = vmatprep.subr.mxu0 0.0
    %1137 = vmatpush1.msra.mxu0 0.0
    %1138 = vmatprep.subr.mxu0 0.0
    %1139 = vmatpush1.msra.mxu0 0.0
    %1140 = vmatprep.subr.mxu0 0.0
    %1141 = vmatpush1.msra.mxu0 0.0
    %1142 = vmatprep.subr.mxu0 0.0
    %1143 = vmatpush1.msra.mxu0 0.0
    %1144 = vmatprep.subr.mxu0 0.0
    %1145 = vmatpush1.msra.mxu0 0.0
    %1146 = vmatprep.subr.mxu0 0.0
    %1147 = vmatpush1.msra.mxu0 0.0
    %1148 = vmatprep.subr.mxu0 0.0
    %1149 = vmatpush1.msra.mxu0 0.0
    %1150 = vmatprep.subr.mxu0 0.0
    %1151 = vmatpush1.msra.mxu0 0.0
    %1152 = vmatprep.subr.mxu0 0.0
    %1153 = vmatpush1.msra.mxu0 0.0
    %1154 = vmatprep.subr.mxu0 0.0
    %1155 = vmatpush1.msra.mxu0 0.0
    %1156 = vmatprep.subr.mxu0 0.0
    %1157 = vmatpush1.msra.mxu0 0.0
    %1158 = vmatprep.subr.mxu0 0.0
    %1159 = vmatpush1.msra.mxu0 0.0
    %1160 = vmatprep.mubr.f32.mxu0 0.0
    %1161 = vmatmul.mubr.f32.gmra.mrb[0].mxu0 %v1094
    %v1162 = vpop.f32.mrb[0].mxu0
    %v1163 = vadd.f32 0.0, %v1162
    %v1164 = vpop.f32.mrb[0].mxu0
    %1165 = vdwg.mxu0
    %v1166 = vmul.f32 %v1089, %v1163
    %v1167 = vpack.c.bf16 %v846, %v846
    %vm1168 = vcmask 253952
    %vm1169 = vsmask.f32 256
    %vm1170 = vmand %vm1168, %vm1169
    %v1171 = vld [vmem:[#allocation2] sm:$0x1]
    %v1172 = vsel %vm1170, %v1167, %v1171
    %1173 = vst [vmem:[#allocation2] sm:$0x1] %v1172
    %v1174 = vpack.c.bf16 %v1166, %v1166
    %v1177 = vunpack.c.l.s4 1983009808
    %v1178 = vunpack.c.0.s8 %v1177
    %v1179 = vlaneseq
    %v1180 = vshrl.u32 %v1179, 7
    %v1181 = vsub.s32 %v1178, %v1180
    %v1182 = vrot.slane %v1174, %v1181
    %v1183 = vrot.slane %v1182, 7
    %vm1185 = vcmask 254977
    %vm1186 = vsmask.f32 1280
    %vm1187 = vmand %vm1185, %vm1186
    %v1188 = vld [vmem:[#allocation2] sm:$0x2]
    %v1189 = vsel %vm1187, %v1183, %v1188
    %1190 = vst [vmem:[#allocation2] sm:$0x2] %v1189
    %v1191 = vlaneseq
    %v1192 = vshrl.u32 %v1191, 7
    %v1193 = vsub.s32 1, %v1192
    %v1194 = vrot.slane %v312, %v1193
    %v1195 = vmul.f32 %v1194, %v480
    %v1196 = vmul.f32 %v1194, %v485
    %v1199 = vrot.slane %v1195, 4
    %v1200 = vrot.slane %v1196, 4
    %v1201 = vsel %vm698, %v1199, %v1200
    %v1202 = vsel %vm273, %v1201, 0
    %v1204 = vsel %vm273, %v1200, 0
    %1206 = vmatprep.subr.mxu0 0.0
    %1207 = vmatpush1.msra.mxu0 %v220
    %1208 = vmatprep.subr.mxu0 0.0
    %1209 = vmatpush1.msra.mxu0 %v221
    %1210 = vmatprep.subr.mxu0 0.0
    %1211 = vmatpush1.msra.mxu0 %v222
    %1212 = vmatprep.subr.mxu0 0.0
    %1213 = vmatpush1.msra.mxu0 %v223
    %1214 = vmatprep.subr.mxu0 0.0
    %1215 = vmatpush1.msra.mxu0 0.0
    %1216 = vmatprep.subr.mxu0 0.0
    %1217 = vmatpush1.msra.mxu0 0.0
    %1218 = vmatprep.subr.mxu0 0.0
    %1219 = vmatpush1.msra.mxu0 0.0
    %1220 = vmatprep.subr.mxu0 0.0
    %1221 = vmatpush1.msra.mxu0 0.0
    %1222 = vmatprep.subr.mxu0 0.0
    %1223 = vmatpush1.msra.mxu0 0.0
    %1224 = vmatprep.subr.mxu0 0.0
    %1225 = vmatpush1.msra.mxu0 0.0
    %1226 = vmatprep.subr.mxu0 0.0
    %1227 = vmatpush1.msra.mxu0 0.0
    %1228 = vmatprep.subr.mxu0 0.0
    %1229 = vmatpush1.msra.mxu0 0.0
    %1230 = vmatprep.subr.mxu0 0.0
    %1231 = vmatpush1.msra.mxu0 0.0
    %1232 = vmatprep.subr.mxu0 0.0
    %1233 = vmatpush1.msra.mxu0 0.0
    %1234 = vmatprep.subr.mxu0 0.0
    %1235 = vmatpush1.msra.mxu0 0.0
    %1236 = vmatprep.subr.mxu0 0.0
    %1237 = vmatpush1.msra.mxu0 0.0
    %1238 = vmatprep.subr.mxu0 0.0
    %1239 = vmatpush1.msra.mxu0 0.0
    %1240 = vmatprep.subr.mxu0 0.0
    %1241 = vmatpush1.msra.mxu0 0.0
    %1242 = vmatprep.subr.mxu0 0.0
    %1243 = vmatpush1.msra.mxu0 0.0
    %1244 = vmatprep.subr.mxu0 0.0
    %1245 = vmatpush1.msra.mxu0 0.0
    %1246 = vmatprep.subr.mxu0 0.0
    %1247 = vmatpush1.msra.mxu0 0.0
    %1248 = vmatprep.subr.mxu0 0.0
    %1249 = vmatpush1.msra.mxu0 0.0
    %1250 = vmatprep.subr.mxu0 0.0
    %1251 = vmatpush1.msra.mxu0 0.0
    %1252 = vmatprep.subr.mxu0 0.0
    %1253 = vmatpush1.msra.mxu0 0.0
    %1254 = vmatprep.subr.mxu0 0.0
    %1255 = vmatpush1.msra.mxu0 0.0
    %1256 = vmatprep.subr.mxu0 0.0
    %1257 = vmatpush1.msra.mxu0 0.0
    %1258 = vmatprep.subr.mxu0 0.0
    %1259 = vmatpush1.msra.mxu0 0.0
    %1260 = vmatprep.subr.mxu0 0.0
    %1261 = vmatpush1.msra.mxu0 0.0
    %1262 = vmatprep.subr.mxu0 0.0
    %1263 = vmatpush1.msra.mxu0 0.0
    %1264 = vmatprep.subr.mxu0 0.0
    %1265 = vmatpush1.msra.mxu0 0.0
    %1266 = vmatprep.subr.mxu0 0.0
    %1267 = vmatpush1.msra.mxu0 0.0
    %1268 = vmatprep.subr.mxu0 0.0
    %1269 = vmatpush1.msra.mxu0 0.0
    %1270 = vmatprep.mubr.f32.mxu0 0.0
    %1271 = vmatmul.mubr.f32.gmra.mrb[0].mxu0 %v1202
    %v1272 = vpop.f32.mrb[0].mxu0
    %v1273 = vadd.f32 0.0, %v1272
    %v1274 = vpop.f32.mrb[0].mxu0
    %1275 = vmatprep.mubr.f32.mxu0 0.0
    %1276 = vmatmul.mubr.f32.gmra.mrb[0].mxu0 %v1204
    %v1277 = vpop.f32.mrb[0].mxu0
    %v1278 = vadd.f32 0.0, %v1277
    %v1279 = vpop.f32.mrb[0].mxu0
    %1280 = vdwg.mxu0
    %v1281 = vsel %vm577, %v1273, -inf
    %v1282 = vsel %vm579, %v1278, -inf
    %v1283 = vmax.f32 %v1281, %v1282
    %v1284 = vrot.slane %v1283, 4
    %v1285 = vmax.f32 %v1283, %v1284
    %v1286 = vrot.slane %v1285, 2
    %v1287 = vmax.f32 %v1285, %v1286
    %v1288 = vrot.slane %v1287, 1
    %v1289 = vmax.f32 %v1287, %v1288
    %v1290 = vsub.f32 %v1273, %v1289
    %v1291 = vsub.f32 %v1278, %v1289
    %v1292 = vmul.f32 %v1290, 1.442695
    %v1293 = vpow.pop %v1292
    %v1294 = vmul.f32 %v1291, 1.442695
    %v1295 = vpow.pop %v1294
    %v1296 = vsel %vm577, %v1293, 0.0
    %v1297 = vsel %vm579, %v1295, 0.0
    %v1298 = vadd.f32 %v1296, %v1297
    %v1299 = vrot.slane %v1298, 4
    %v1300 = vadd.f32 %v1298, %v1299
    %v1301 = vrot.slane %v1300, 2
    %v1302 = vadd.f32 %v1300, %v1301
    %v1303 = vrot.slane %v1302, 1
    %v1304 = vadd.f32 %v1302, %v1303
    %v1306 = vsel %vm577, %v1293, 0
    %v1309 = vsel %vm577, %v1295, 0
    %1311 = vmatprep.subr.mxu0 0.0
    %1312 = vmatpush1.msra.mxu0 %v231
    %1313 = vmatprep.subr.mxu0 0.0
    %1314 = vmatpush1.msra.mxu0 0.0
    %1315 = vmatprep.subr.mxu0 0.0
    %1316 = vmatpush1.msra.mxu0 0.0
    %1317 = vmatprep.subr.mxu0 0.0
    %1318 = vmatpush1.msra.mxu0 0.0
    %1319 = vmatprep.subr.mxu0 0.0
    %1320 = vmatpush1.msra.mxu0 0.0
    %1321 = vmatprep.subr.mxu0 0.0
    %1322 = vmatpush1.msra.mxu0 0.0
    %1323 = vmatprep.subr.mxu0 0.0
    %1324 = vmatpush1.msra.mxu0 0.0
    %1325 = vmatprep.subr.mxu0 0.0
    %1326 = vmatpush1.msra.mxu0 0.0
    %1327 = vmatprep.subr.mxu0 0.0
    %1328 = vmatpush1.msra.mxu0 0.0
    %1329 = vmatprep.subr.mxu0 0.0
    %1330 = vmatpush1.msra.mxu0 0.0
    %1331 = vmatprep.subr.mxu0 0.0
    %1332 = vmatpush1.msra.mxu0 0.0
    %1333 = vmatprep.subr.mxu0 0.0
    %1334 = vmatpush1.msra.mxu0 0.0
    %1335 = vmatprep.subr.mxu0 0.0
    %1336 = vmatpush1.msra.mxu0 0.0
    %1337 = vmatprep.subr.mxu0 0.0
    %1338 = vmatpush1.msra.mxu0 0.0
    %1339 = vmatprep.subr.mxu0 0.0
    %1340 = vmatpush1.msra.mxu0 0.0
    %1341 = vmatprep.subr.mxu0 0.0
    %1342 = vmatpush1.msra.mxu0 0.0
    %1343 = vmatprep.subr.mxu0 0.0
    %1344 = vmatpush1.msra.mxu0 0.0
    %1345 = vmatprep.subr.mxu0 0.0
    %1346 = vmatpush1.msra.mxu0 0.0
    %1347 = vmatprep.subr.mxu0 0.0
    %1348 = vmatpush1.msra.mxu0 0.0
    %1349 = vmatprep.subr.mxu0 0.0
    %1350 = vmatpush1.msra.mxu0 0.0
    %1351 = vmatprep.subr.mxu0 0.0
    %1352 = vmatpush1.msra.mxu0 0.0
    %1353 = vmatprep.subr.mxu0 0.0
    %1354 = vmatpush1.msra.mxu0 0.0
    %1355 = vmatprep.subr.mxu0 0.0
    %1356 = vmatpush1.msra.mxu0 0.0
    %1357 = vmatprep.subr.mxu0 0.0
    %1358 = vmatpush1.msra.mxu0 0.0
    %1359 = vmatprep.subr.mxu0 0.0
    %1360 = vmatpush1.msra.mxu0 0.0
    %1361 = vmatprep.subr.mxu0 0.0
    %1362 = vmatpush1.msra.mxu0 0.0
    %1363 = vmatprep.subr.mxu0 0.0
    %1364 = vmatpush1.msra.mxu0 0.0
    %1365 = vmatprep.subr.mxu0 0.0
    %1366 = vmatpush1.msra.mxu0 0.0
    %1367 = vmatprep.subr.mxu0 0.0
    %1368 = vmatpush1.msra.mxu0 0.0
    %1369 = vmatprep.subr.mxu0 0.0
    %1370 = vmatpush1.msra.mxu0 0.0
    %1371 = vmatprep.subr.mxu0 0.0
    %1372 = vmatpush1.msra.mxu0 0.0
    %1373 = vmatprep.subr.mxu0 0.0
    %1374 = vmatpush1.msra.mxu0 0.0
    %1375 = vmatprep.mubr.f32.mxu0 0.0
    %1376 = vmatmul.mubr.f32.gmra.mrb[0].mxu0 %v1306
    %v1377 = vpop.f32.mrb[0].mxu0
    %v1378 = vadd.f32 0.0, %v1377
    %v1379 = vpop.f32.mrb[0].mxu0
    %1380 = vmatprep.mubr.f32.mxu0 0.0
    %1381 = vmatmul.mubr.f32.gmra.mrb[0].mxu0 %v1309
    %v1382 = vpop.f32.mrb[0].mxu0
    %v1383 = vadd.f32 0.0, %v1382
    %v1384 = vpop.f32.mrb[0].mxu0
    %1385 = vdwg.mxu0
    %v1387 = vrot.slane %v480, 4
    %v1388 = vrot.slane %v485, 4
    %v1389 = vsel %vm698, %v1387, %v1388
    %1390 = vrot.lane.b32.xlu0 %v1389, 96
    %v1391 = vpop.permute.xlu0 %1390
    %1392 = vrot.lane.b32.xlu0 %v1388, 96
    %v1393 = vpop.permute.xlu0 %1392
    %v1396 = vmul.f32 %v1378, %v1391
    %v1397 = vmul.f32 %v1383, %v1393
    %v1399 = vsel %vm698, %v1397, 0
    %1401 = vmatprep.subr.mxu0 0.0
    %1402 = vmatpush1.msra.mxu0 %v1396
    %1403 = vmatprep.subr.mxu0 0.0
    %1404 = vmatpush1.msra.mxu0 %v1399
    %1405 = vmatprep.subr.mxu0 0.0
    %1406 = vmatpush1.msra.mxu0 0.0
    %1407 = vmatprep.subr.mxu0 0.0
    %1408 = vmatpush1.msra.mxu0 0.0
    %1409 = vmatprep.subr.mxu0 0.0
    %1410 = vmatpush1.msra.mxu0 0.0
    %1411 = vmatprep.subr.mxu0 0.0
    %1412 = vmatpush1.msra.mxu0 0.0
    %1413 = vmatprep.subr.mxu0 0.0
    %1414 = vmatpush1.msra.mxu0 0.0
    %1415 = vmatprep.subr.mxu0 0.0
    %1416 = vmatpush1.msra.mxu0 0.0
    %1417 = vmatprep.subr.mxu0 0.0
    %1418 = vmatpush1.msra.mxu0 0.0
    %1419 = vmatprep.subr.mxu0 0.0
    %1420 = vmatpush1.msra.mxu0 0.0
    %1421 = vmatprep.subr.mxu0 0.0
    %1422 = vmatpush1.msra.mxu0 0.0
    %1423 = vmatprep.subr.mxu0 0.0
    %1424 = vmatpush1.msra.mxu0 0.0
    %1425 = vmatprep.subr.mxu0 0.0
    %1426 = vmatpush1.msra.mxu0 0.0
    %1427 = vmatprep.subr.mxu0 0.0
    %1428 = vmatpush1.msra.mxu0 0.0
    %1429 = vmatprep.subr.mxu0 0.0
    %1430 = vmatpush1.msra.mxu0 0.0
    %1431 = vmatprep.subr.mxu0 0.0
    %1432 = vmatpush1.msra.mxu0 0.0
    %1433 = vmatprep.subr.mxu0 0.0
    %1434 = vmatpush1.msra.mxu0 0.0
    %1435 = vmatprep.subr.mxu0 0.0
    %1436 = vmatpush1.msra.mxu0 0.0
    %1437 = vmatprep.subr.mxu0 0.0
    %1438 = vmatpush1.msra.mxu0 0.0
    %1439 = vmatprep.subr.mxu0 0.0
    %1440 = vmatpush1.msra.mxu0 0.0
    %1441 = vmatprep.subr.mxu0 0.0
    %1442 = vmatpush1.msra.mxu0 0.0
    %1443 = vmatprep.subr.mxu0 0.0
    %1444 = vmatpush1.msra.mxu0 0.0
    %1445 = vmatprep.subr.mxu0 0.0
    %1446 = vmatpush1.msra.mxu0 0.0
    %1447 = vmatprep.subr.mxu0 0.0
    %1448 = vmatpush1.msra.mxu0 0.0
    %1449 = vmatprep.subr.mxu0 0.0
    %1450 = vmatpush1.msra.mxu0 0.0
    %1451 = vmatprep.subr.mxu0 0.0
    %1452 = vmatpush1.msra.mxu0 0.0
    %1453 = vmatprep.subr.mxu0 0.0
    %1454 = vmatpush1.msra.mxu0 0.0
    %1455 = vmatprep.subr.mxu0 0.0
    %1456 = vmatpush1.msra.mxu0 0.0
    %1457 = vmatprep.subr.mxu0 0.0
    %1458 = vmatpush1.msra.mxu0 0.0
    %1459 = vmatprep.subr.mxu0 0.0
    %1460 = vmatpush1.msra.mxu0 0.0
    %1461 = vmatprep.subr.mxu0 0.0
    %1462 = vmatpush1.msra.mxu0 0.0
    %1463 = vmatprep.subr.mxu0 0.0
    %1464 = vmatpush1.msra.mxu0 0.0
    %1465 = vmatprep.mubr.f32.mxu0 0.0
    %1466 = vmatmul.mubr.f32.gmra.mrb[0].mxu0 %v696
    %v1467 = vpop.f32.mrb[0].mxu0
    %v1468 = vadd.f32 0.0, %v1467
    %v1469 = vpop.f32.mrb[0].mxu0
    %1470 = vdwg.mxu0
    %v1471 = vrcp.pop %v1304
    %v1473 = vsel %vm577, %v1471, 0
    %1475 = vmatprep.subr.mxu0 0.0
    %1476 = vmatpush1.msra.mxu0 %v231
    %1477 = vmatprep.subr.mxu0 0.0
    %1478 = vmatpush1.msra.mxu0 0.0
    %1479 = vmatprep.subr.mxu0 0.0
    %1480 = vmatpush1.msra.mxu0 0.0
    %1481 = vmatprep.subr.mxu0 0.0
    %1482 = vmatpush1.msra.mxu0 0.0
    %1483 = vmatprep.subr.mxu0 0.0
    %1484 = vmatpush1.msra.mxu0 0.0
    %1485 = vmatprep.subr.mxu0 0.0
    %1486 = vmatpush1.msra.mxu0 0.0
    %1487 = vmatprep.subr.mxu0 0.0
    %1488 = vmatpush1.msra.mxu0 0.0
    %1489 = vmatprep.subr.mxu0 0.0
    %1490 = vmatpush1.msra.mxu0 0.0
    %1491 = vmatprep.subr.mxu0 0.0
    %1492 = vmatpush1.msra.mxu0 0.0
    %1493 = vmatprep.subr.mxu0 0.0
    %1494 = vmatpush1.msra.mxu0 0.0
    %1495 = vmatprep.subr.mxu0 0.0
    %1496 = vmatpush1.msra.mxu0 0.0
    %1497 = vmatprep.subr.mxu0 0.0
    %1498 = vmatpush1.msra.mxu0 0.0
    %1499 = vmatprep.subr.mxu0 0.0
    %1500 = vmatpush1.msra.mxu0 0.0
    %1501 = vmatprep.subr.mxu0 0.0
    %1502 = vmatpush1.msra.mxu0 0.0
    %1503 = vmatprep.subr.mxu0 0.0
    %1504 = vmatpush1.msra.mxu0 0.0
    %1505 = vmatprep.subr.mxu0 0.0
    %1506 = vmatpush1.msra.mxu0 0.0
    %1507 = vmatprep.subr.mxu0 0.0
    %1508 = vmatpush1.msra.mxu0 0.0
    %1509 = vmatprep.subr.mxu0 0.0
    %1510 = vmatpush1.msra.mxu0 0.0
    %1511 = vmatprep.subr.mxu0 0.0
    %1512 = vmatpush1.msra.mxu0 0.0
    %1513 = vmatprep.subr.mxu0 0.0
    %1514 = vmatpush1.msra.mxu0 0.0
    %1515 = vmatprep.subr.mxu0 0.0
    %1516 = vmatpush1.msra.mxu0 0.0
    %1517 = vmatprep.subr.mxu0 0.0
    %1518 = vmatpush1.msra.mxu0 0.0
    %1519 = vmatprep.subr.mxu0 0.0
    %1520 = vmatpush1.msra.mxu0 0.0
    %1521 = vmatprep.subr.mxu0 0.0
    %1522 = vmatpush1.msra.mxu0 0.0
    %1523 = vmatprep.subr.mxu0 0.0
    %1524 = vmatpush1.msra.mxu0 0.0
    %1525 = vmatprep.subr.mxu0 0.0
    %1526 = vmatpush1.msra.mxu0 0.0
    %1527 = vmatprep.subr.mxu0 0.0
    %1528 = vmatpush1.msra.mxu0 0.0
    %1529 = vmatprep.subr.mxu0 0.0
    %1530 = vmatpush1.msra.mxu0 0.0
    %1531 = vmatprep.subr.mxu0 0.0
    %1532 = vmatpush1.msra.mxu0 0.0
    %1533 = vmatprep.subr.mxu0 0.0
    %1534 = vmatpush1.msra.mxu0 0.0
    %1535 = vmatprep.subr.mxu0 0.0
    %1536 = vmatpush1.msra.mxu0 0.0
    %1537 = vmatprep.subr.mxu0 0.0
    %1538 = vmatpush1.msra.mxu0 0.0
    %1539 = vmatprep.mubr.f32.mxu0 0.0
    %1540 = vmatmul.mubr.f32.gmra.mrb[0].mxu0 %v1473
    %v1541 = vpop.f32.mrb[0].mxu0
    %v1542 = vadd.f32 0.0, %v1541
    %v1543 = vpop.f32.mrb[0].mxu0
    %1544 = vdwg.mxu0
    %v1545 = vmul.f32 %v1468, %v1542
    %v1546 = vlaneseq
    %v1547 = vshrl.u32 %v1546, 7
    %v1548 = vsub.s32 1, %v1547
    %v1549 = vrot.slane %v356, %v1548
    %v1550 = vmul.f32 %v1549, %v425
    %v1552 = vsel %vm273, %v1550, 0
    %1554 = vmatprep.subr.mxu0 0.0
    %1555 = vmatpush1.msra.mxu0 %v220
    %1556 = vmatprep.subr.mxu0 0.0
    %1557 = vmatpush1.msra.mxu0 %v221
    %1558 = vmatprep.subr.mxu0 0.0
    %1559 = vmatpush1.msra.mxu0 %v222
    %1560 = vmatprep.subr.mxu0 0.0
    %1561 = vmatpush1.msra.mxu0 %v223
    %1562 = vmatprep.subr.mxu0 0.0
    %1563 = vmatpush1.msra.mxu0 0.0
    %1564 = vmatprep.subr.mxu0 0.0
    %1565 = vmatpush1.msra.mxu0 0.0
    %1566 = vmatprep.subr.mxu0 0.0
    %1567 = vmatpush1.msra.mxu0 0.0
    %1568 = vmatprep.subr.mxu0 0.0
    %1569 = vmatpush1.msra.mxu0 0.0
    %1570 = vmatprep.subr.mxu0 0.0
    %1571 = vmatpush1.msra.mxu0 0.0
    %1572 = vmatprep.subr.mxu0 0.0
    %1573 = vmatpush1.msra.mxu0 0.0
    %1574 = vmatprep.subr.mxu0 0.0
    %1575 = vmatpush1.msra.mxu0 0.0
    %1576 = vmatprep.subr.mxu0 0.0
    %1577 = vmatpush1.msra.mxu0 0.0
    %1578 = vmatprep.subr.mxu0 0.0
    %1579 = vmatpush1.msra.mxu0 0.0
    %1580 = vmatprep.subr.mxu0 0.0
    %1581 = vmatpush1.msra.mxu0 0.0
    %1582 = vmatprep.subr.mxu0 0.0
    %1583 = vmatpush1.msra.mxu0 0.0
    %1584 = vmatprep.subr.mxu0 0.0
    %1585 = vmatpush1.msra.mxu0 0.0
    %1586 = vmatprep.subr.mxu0 0.0
    %1587 = vmatpush1.msra.mxu0 0.0
    %1588 = vmatprep.subr.mxu0 0.0
    %1589 = vmatpush1.msra.mxu0 0.0
    %1590 = vmatprep.subr.mxu0 0.0
    %1591 = vmatpush1.msra.mxu0 0.0
    %1592 = vmatprep.subr.mxu0 0.0
    %1593 = vmatpush1.msra.mxu0 0.0
    %1594 = vmatprep.subr.mxu0 0.0
    %1595 = vmatpush1.msra.mxu0 0.0
    %1596 = vmatprep.subr.mxu0 0.0
    %1597 = vmatpush1.msra.mxu0 0.0
    %1598 = vmatprep.subr.mxu0 0.0
    %1599 = vmatpush1.msra.mxu0 0.0
    %1600 = vmatprep.subr.mxu0 0.0
    %1601 = vmatpush1.msra.mxu0 0.0
    %1602 = vmatprep.subr.mxu0 0.0
    %1603 = vmatpush1.msra.mxu0 0.0
    %1604 = vmatprep.subr.mxu0 0.0
    %1605 = vmatpush1.msra.mxu0 0.0
    %1606 = vmatprep.subr.mxu0 0.0
    %1607 = vmatpush1.msra.mxu0 0.0
    %1608 = vmatprep.subr.mxu0 0.0
    %1609 = vmatpush1.msra.mxu0 0.0
    %1610 = vmatprep.subr.mxu0 0.0
    %1611 = vmatpush1.msra.mxu0 0.0
    %1612 = vmatprep.subr.mxu0 0.0
    %1613 = vmatpush1.msra.mxu0 0.0
    %1614 = vmatprep.subr.mxu0 0.0
    %1615 = vmatpush1.msra.mxu0 0.0
    %1616 = vmatprep.subr.mxu0 0.0
    %1617 = vmatpush1.msra.mxu0 0.0
    %1618 = vmatprep.mubr.f32.mxu0 0.0
    %1619 = vmatmul.mubr.f32.gmra.mrb[0].mxu0 %v1552
    %v1620 = vpop.f32.mrb[0].mxu0
    %v1621 = vadd.f32 0.0, %v1620
    %v1622 = vpop.f32.mrb[0].mxu0
    %1623 = vdwg.mxu0
    %v1624 = vsel %vm577, %v1621, -inf
    %v1625 = vrot.slane %v1624, 4
    %v1626 = vmax.f32 %v1624, %v1625
    %v1627 = vrot.slane %v1626, 2
    %v1628 = vmax.f32 %v1626, %v1627
    %v1629 = vrot.slane %v1628, 1
    %v1630 = vmax.f32 %v1628, %v1629
    %v1631 = vsub.f32 %v1621, %v1630
    %v1632 = vmul.f32 %v1631, 1.442695
    %v1633 = vpow.pop %v1632
    %v1634 = vsel %vm577, %v1633, 0.0
    %v1635 = vrot.slane %v1634, 4
    %v1636 = vadd.f32 %v1634, %v1635
    %v1637 = vrot.slane %v1636, 2
    %v1638 = vadd.f32 %v1636, %v1637
    %v1639 = vrot.slane %v1638, 1
    %v1640 = vadd.f32 %v1638, %v1639
    %v1642 = vsel %vm577, %v1633, 0
    %1644 = vmatprep.subr.mxu0 0.0
    %1645 = vmatpush1.msra.mxu0 %v231
    %1646 = vmatprep.subr.mxu0 0.0
    %1647 = vmatpush1.msra.mxu0 0.0
    %1648 = vmatprep.subr.mxu0 0.0
    %1649 = vmatpush1.msra.mxu0 0.0
    %1650 = vmatprep.subr.mxu0 0.0
    %1651 = vmatpush1.msra.mxu0 0.0
    %1652 = vmatprep.subr.mxu0 0.0
    %1653 = vmatpush1.msra.mxu0 0.0
    %1654 = vmatprep.subr.mxu0 0.0
    %1655 = vmatpush1.msra.mxu0 0.0
    %1656 = vmatprep.subr.mxu0 0.0
    %1657 = vmatpush1.msra.mxu0 0.0
    %1658 = vmatprep.subr.mxu0 0.0
    %1659 = vmatpush1.msra.mxu0 0.0
    %1660 = vmatprep.subr.mxu0 0.0
    %1661 = vmatpush1.msra.mxu0 0.0
    %1662 = vmatprep.subr.mxu0 0.0
    %1663 = vmatpush1.msra.mxu0 0.0
    %1664 = vmatprep.subr.mxu0 0.0
    %1665 = vmatpush1.msra.mxu0 0.0
    %1666 = vmatprep.subr.mxu0 0.0
    %1667 = vmatpush1.msra.mxu0 0.0
    %1668 = vmatprep.subr.mxu0 0.0
    %1669 = vmatpush1.msra.mxu0 0.0
    %1670 = vmatprep.subr.mxu0 0.0
    %1671 = vmatpush1.msra.mxu0 0.0
    %1672 = vmatprep.subr.mxu0 0.0
    %1673 = vmatpush1.msra.mxu0 0.0
    %1674 = vmatprep.subr.mxu0 0.0
    %1675 = vmatpush1.msra.mxu0 0.0
    %1676 = vmatprep.subr.mxu0 0.0
    %1677 = vmatpush1.msra.mxu0 0.0
    %1678 = vmatprep.subr.mxu0 0.0
    %1679 = vmatpush1.msra.mxu0 0.0
    %1680 = vmatprep.subr.mxu0 0.0
    %1681 = vmatpush1.msra.mxu0 0.0
    %1682 = vmatprep.subr.mxu0 0.0
    %1683 = vmatpush1.msra.mxu0 0.0
    %1684 = vmatprep.subr.mxu0 0.0
    %1685 = vmatpush1.msra.mxu0 0.0
    %1686 = vmatprep.subr.mxu0 0.0
    %1687 = vmatpush1.msra.mxu0 0.0
    %1688 = vmatprep.subr.mxu0 0.0
    %1689 = vmatpush1.msra.mxu0 0.0
    %1690 = vmatprep.subr.mxu0 0.0
    %1691 = vmatpush1.msra.mxu0 0.0
    %1692 = vmatprep.subr.mxu0 0.0
    %1693 = vmatpush1.msra.mxu0 0.0
    %1694 = vmatprep.subr.mxu0 0.0
    %1695 = vmatpush1.msra.mxu0 0.0
    %1696 = vmatprep.subr.mxu0 0.0
    %1697 = vmatpush1.msra.mxu0 0.0
    %1698 = vmatprep.subr.mxu0 0.0
    %1699 = vmatpush1.msra.mxu0 0.0
    %1700 = vmatprep.subr.mxu0 0.0
    %1701 = vmatpush1.msra.mxu0 0.0
    %1702 = vmatprep.subr.mxu0 0.0
    %1703 = vmatpush1.msra.mxu0 0.0
    %1704 = vmatprep.subr.mxu0 0.0
    %1705 = vmatpush1.msra.mxu0 0.0
    %1706 = vmatprep.subr.mxu0 0.0
    %1707 = vmatpush1.msra.mxu0 0.0
    %1708 = vmatprep.mubr.f32.mxu0 0.0
    %1709 = vmatmul.mubr.f32.gmra.mrb[0].mxu0 %v1642
    %v1710 = vpop.f32.mrb[0].mxu0
    %v1711 = vadd.f32 0.0, %v1710
    %v1712 = vpop.f32.mrb[0].mxu0
    %1713 = vdwg.mxu0
    %1715 = vrot.lane.b32.xlu0 %v425, 96
    %v1716 = vpop.permute.xlu0 %1715
    %v1718 = vmul.f32 %v1711, %v1716
    %1719 = vmatprep.subr.mxu0 0.0
    %1720 = vmatpush1.msra.mxu0 %v1718
    %1721 = vmatprep.subr.mxu0 0.0
    %1722 = vmatpush1.msra.mxu0 0.0
    %1723 = vmatprep.subr.mxu0 0.0
    %1724 = vmatpush1.msra.mxu0 0.0
    %1725 = vmatprep.subr.mxu0 0.0
    %1726 = vmatpush1.msra.mxu0 0.0
    %1727 = vmatprep.subr.mxu0 0.0
    %1728 = vmatpush1.msra.mxu0 0.0
    %1729 = vmatprep.subr.mxu0 0.0
    %1730 = vmatpush1.msra.mxu0 0.0
    %1731 = vmatprep.subr.mxu0 0.0
    %1732 = vmatpush1.msra.mxu0 0.0
    %1733 = vmatprep.subr.mxu0 0.0
    %1734 = vmatpush1.msra.mxu0 0.0
    %1735 = vmatprep.subr.mxu0 0.0
    %1736 = vmatpush1.msra.mxu0 0.0
    %1737 = vmatprep.subr.mxu0 0.0
    %1738 = vmatpush1.msra.mxu0 0.0
    %1739 = vmatprep.subr.mxu0 0.0
    %1740 = vmatpush1.msra.mxu0 0.0
    %1741 = vmatprep.subr.mxu0 0.0
    %1742 = vmatpush1.msra.mxu0 0.0
    %1743 = vmatprep.subr.mxu0 0.0
    %1744 = vmatpush1.msra.mxu0 0.0
    %1745 = vmatprep.subr.mxu0 0.0
    %1746 = vmatpush1.msra.mxu0 0.0
    %1747 = vmatprep.subr.mxu0 0.0
    %1748 = vmatpush1.msra.mxu0 0.0
    %1749 = vmatprep.subr.mxu0 0.0
    %1750 = vmatpush1.msra.mxu0 0.0
    %1751 = vmatprep.subr.mxu0 0.0
    %1752 = vmatpush1.msra.mxu0 0.0
    %1753 = vmatprep.subr.mxu0 0.0
    %1754 = vmatpush1.msra.mxu0 0.0
    %1755 = vmatprep.subr.mxu0 0.0
    %1756 = vmatpush1.msra.mxu0 0.0
    %1757 = vmatprep.subr.mxu0 0.0
    %1758 = vmatpush1.msra.mxu0 0.0
    %1759 = vmatprep.subr.mxu0 0.0
    %1760 = vmatpush1.msra.mxu0 0.0
    %1761 = vmatprep.subr.mxu0 0.0
    %1762 = vmatpush1.msra.mxu0 0.0
    %1763 = vmatprep.subr.mxu0 0.0
    %1764 = vmatpush1.msra.mxu0 0.0
    %1765 = vmatprep.subr.mxu0 0.0
    %1766 = vmatpush1.msra.mxu0 0.0
    %1767 = vmatprep.subr.mxu0 0.0
    %1768 = vmatpush1.msra.mxu0 0.0
    %1769 = vmatprep.subr.mxu0 0.0
    %1770 = vmatpush1.msra.mxu0 0.0
    %1771 = vmatprep.subr.mxu0 0.0
    %1772 = vmatpush1.msra.mxu0 0.0
    %1773 = vmatprep.subr.mxu0 0.0
    %1774 = vmatpush1.msra.mxu0 0.0
    %1775 = vmatprep.subr.mxu0 0.0
    %1776 = vmatpush1.msra.mxu0 0.0
    %1777 = vmatprep.subr.mxu0 0.0
    %1778 = vmatpush1.msra.mxu0 0.0
    %1779 = vmatprep.subr.mxu0 0.0
    %1780 = vmatpush1.msra.mxu0 0.0
    %1781 = vmatprep.subr.mxu0 0.0
    %1782 = vmatpush1.msra.mxu0 0.0
    %1783 = vmatprep.mubr.f32.mxu0 0.0
    %1784 = vmatmul.mubr.f32.gmra.mrb[0].mxu0 %v1020
    %v1785 = vpop.f32.mrb[0].mxu0
    %v1786 = vadd.f32 0.0, %v1785
    %v1787 = vpop.f32.mrb[0].mxu0
    %1788 = vdwg.mxu0
    %v1789 = vrcp.pop %v1640
    %v1791 = vsel %vm577, %v1789, 0
    %1793 = vmatprep.subr.mxu0 0.0
    %1794 = vmatpush1.msra.mxu0 %v231
    %1795 = vmatprep.subr.mxu0 0.0
    %1796 = vmatpush1.msra.mxu0 0.0
    %1797 = vmatprep.subr.mxu0 0.0
    %1798 = vmatpush1.msra.mxu0 0.0
    %1799 = vmatprep.subr.mxu0 0.0
    %1800 = vmatpush1.msra.mxu0 0.0
    %1801 = vmatprep.subr.mxu0 0.0
    %1802 = vmatpush1.msra.mxu0 0.0
    %1803 = vmatprep.subr.mxu0 0.0
    %1804 = vmatpush1.msra.mxu0 0.0
    %1805 = vmatprep.subr.mxu0 0.0
    %1806 = vmatpush1.msra.mxu0 0.0
    %1807 = vmatprep.subr.mxu0 0.0
    %1808 = vmatpush1.msra.mxu0 0.0
    %1809 = vmatprep.subr.mxu0 0.0
    %1810 = vmatpush1.msra.mxu0 0.0
    %1811 = vmatprep.subr.mxu0 0.0
    %1812 = vmatpush1.msra.mxu0 0.0
    %1813 = vmatprep.subr.mxu0 0.0
    %1814 = vmatpush1.msra.mxu0 0.0
    %1815 = vmatprep.subr.mxu0 0.0
    %1816 = vmatpush1.msra.mxu0 0.0
    %1817 = vmatprep.subr.mxu0 0.0
    %1818 = vmatpush1.msra.mxu0 0.0
    %1819 = vmatprep.subr.mxu0 0.0
    %1820 = vmatpush1.msra.mxu0 0.0
    %1821 = vmatprep.subr.mxu0 0.0
    %1822 = vmatpush1.msra.mxu0 0.0
    %1823 = vmatprep.subr.mxu0 0.0
    %1824 = vmatpush1.msra.mxu0 0.0
    %1825 = vmatprep.subr.mxu0 0.0
    %1826 = vmatpush1.msra.mxu0 0.0
    %1827 = vmatprep.subr.mxu0 0.0
    %1828 = vmatpush1.msra.mxu0 0.0
    %1829 = vmatprep.subr.mxu0 0.0
    %1830 = vmatpush1.msra.mxu0 0.0
    %1831 = vmatprep.subr.mxu0 0.0
    %1832 = vmatpush1.msra.mxu0 0.0
    %1833 = vmatprep.subr.mxu0 0.0
    %1834 = vmatpush1.msra.mxu0 0.0
    %1835 = vmatprep.subr.mxu0 0.0
    %1836 = vmatpush1.msra.mxu0 0.0
    %1837 = vmatprep.subr.mxu0 0.0
    %1838 = vmatpush1.msra.mxu0 0.0
    %1839 = vmatprep.subr.mxu0 0.0
    %1840 = vmatpush1.msra.mxu0 0.0
    %1841 = vmatprep.subr.mxu0 0.0
    %1842 = vmatpush1.msra.mxu0 0.0
    %1843 = vmatprep.subr.mxu0 0.0
    %1844 = vmatpush1.msra.mxu0 0.0
    %1845 = vmatprep.subr.mxu0 0.0
    %1846 = vmatpush1.msra.mxu0 0.0
    %1847 = vmatprep.subr.mxu0 0.0
    %1848 = vmatpush1.msra.mxu0 0.0
    %1849 = vmatprep.subr.mxu0 0.0
    %1850 = vmatpush1.msra.mxu0 0.0
    %1851 = vmatprep.subr.mxu0 0.0
    %1852 = vmatpush1.msra.mxu0 0.0
    %1853 = vmatprep.subr.mxu0 0.0
    %1854 = vmatpush1.msra.mxu0 0.0
    %1855 = vmatprep.subr.mxu0 0.0
    %1856 = vmatpush1.msra.mxu0 0.0
    %1857 = vmatprep.mubr.f32.mxu0 0.0
    %1858 = vmatmul.mubr.f32.gmra.mrb[0].mxu0 %v1791
    %v1859 = vpop.f32.mrb[0].mxu0
    %v1860 = vadd.f32 0.0, %v1859
    %v1861 = vpop.f32.mrb[0].mxu0
    %1862 = vdwg.mxu0
    %v1863 = vmul.f32 %v1786, %v1860
    %v1864 = vpack.c.bf16 %v1545, %v1545
    %v1867 = vunpack.c.l.s4 1983009808
    %v1868 = vunpack.c.0.s8 %v1867
    %v1869 = vlaneseq
    %v1870 = vshrl.u32 %v1869, 7
    %v1871 = vsub.s32 %v1868, %v1870
    %v1872 = vrot.slane %v1864, %v1871
    %v1874 = vshll.u32 %v1872, 16
    %vm1877 = vsmask.f32 7938
    %vm1878 = vmand %vm1168, %vm1877
    %v1879 = vld [vmem:[#allocation2] sm:$0x1]
    %v1880 = vsel %vm1878, %v1874, %v1879
    %1881 = vst [vmem:[#allocation2] sm:$0x1] %v1880
    %v1882 = vpack.c.bf16 %v1863, %v1863
    %v1885 = vunpack.c.l.s4 1983009808
    %v1886 = vunpack.c.0.s8 %v1885
    %v1887 = vlaneseq
    %v1888 = vshrl.u32 %v1887, 7
    %v1889 = vsub.s32 %v1886, %v1888
    %v1890 = vrot.slane %v1882, %v1889
    %v1892 = vshll.u32 %v1890, 16
    %v1894 = vrot.slane %v1892, 7
    %vm1896 = vsmask.f32 7942
    %vm1897 = vmand %vm1185, %vm1896
    %v1898 = vld [vmem:[#allocation2] sm:$0x2]
    %v1899 = vsel %vm1897, %v1894, %v1898
    %1900 = vst [vmem:[#allocation2] sm:$0x2] %v1899
    %v1901 = vld [vmem:[#allocation2] sm:$0x3]
    %v1903 = vlaneseq
    %v1904 = vshrl.u32 %v1903, 7
    %v1905 = vsub.s32 0, %v1904
    %v1906 = vrot.slane %v253, %v1905
    %v1912 = vunpack.c.l.b16 %v247
    %v1913 = vunpack.c.l.b16 %v248
    %v1914 = vunpack.c.l.b16 %v249
    %v1915 = vunpack.c.l.b16 %v250
    %v1916 = vpack.c.b16 %v1913, %v1912
    %v1917 = vpack.c.b16 %v1915, %v1914
    %v1921 = vsel %vm273, %v1901, 0
    %1923 = vmatprep.subr.bf16.mxu0 0
    %1924 = vmatpush1.bf16.msra.mxu0 %v1916
    %1925 = vmatprep.subr.bf16.mxu0 0
    %1926 = vmatpush1.bf16.msra.mxu0 %v1917
    %1927 = vmatprep.subr.bf16.mxu0 0
    %1928 = vmatpush1.bf16.msra.mxu0 0
    %1929 = vmatprep.subr.bf16.mxu0 0
    %1930 = vmatpush1.bf16.msra.mxu0 0
    %1931 = vmatprep.subr.bf16.mxu0 0
    %1932 = vmatpush1.bf16.msra.mxu0 0
    %1933 = vmatprep.subr.bf16.mxu0 0
    %1934 = vmatpush1.bf16.msra.mxu0 0
    %1935 = vmatprep.subr.bf16.mxu0 0
    %1936 = vmatpush1.bf16.msra.mxu0 0
    %1937 = vmatprep.subr.bf16.mxu0 0
    %1938 = vmatpush1.bf16.msra.mxu0 0
    %1939 = vmatprep.subr.bf16.mxu0 0
    %1940 = vmatpush1.bf16.msra.mxu0 0
    %1941 = vmatprep.subr.bf16.mxu0 0
    %1942 = vmatpush1.bf16.msra.mxu0 0
    %1943 = vmatprep.subr.bf16.mxu0 0
    %1944 = vmatpush1.bf16.msra.mxu0 0
    %1945 = vmatprep.subr.bf16.mxu0 0
    %1946 = vmatpush1.bf16.msra.mxu0 0
    %1947 = vmatprep.subr.bf16.mxu0 0
    %1948 = vmatpush1.bf16.msra.mxu0 0
    %1949 = vmatprep.subr.bf16.mxu0 0
    %1950 = vmatpush1.bf16.msra.mxu0 0
    %1951 = vmatprep.subr.bf16.mxu0 0
    %1952 = vmatpush1.bf16.msra.mxu0 0
    %1953 = vmatprep.subr.bf16.mxu0 0
    %1954 = vmatpush1.bf16.msra.mxu0 0
    %1955 = vmatprep.mubr.bf16.mxu0 0
    %1956 = vmatmul.mubr.bf16.gmra.mrb[0].mxu0 %v1921
    %v1957 = vpop.f32.mrb[0].mxu0
    %v1958 = vadd.f32 %v1906, %v1957
    %v1959 = vpop.f32.mrb[0].mxu0
    %v1960 = vpop.f32.mrb[0].mxu0
    %v1961 = vpop.f32.mrb[0].mxu0
    %1962 = vdwg.mxu0
    %v1963 = vsub.f32 %v232, %v233
    %v1964 = vand.u32 2147483647, %v1963
    %v1965 = vld [vmem:[#allocation20] sm:$0xff]
    %v1966 = vld [vmem:[#allocation20 + $0x8] sm:$0xff]
    %v1967 = vld [vmem:[#allocation20 + $0x10] sm:$0xff]
    %v1968 = vld [vmem:[#allocation20 + $0x18] sm:$0xff]
    %v1969 = vld [vmem:[#allocation20 + $0x20] sm:$0xff]
    %v1970 = vld [vmem:[#allocation20 + $0x28] sm:$0xff]
    %v1971 = vld [vmem:[#allocation20 + $0x30] sm:$0xff]
    %v1972 = vld [vmem:[#allocation20 + $0x38] sm:$0xff]
    %v1973 = vld [vmem:[#allocation20 + $0x40] sm:$0xff]
    %v1974 = vld [vmem:[#allocation20 + $0x48] sm:$0xff]
    %v1975 = vld [vmem:[#allocation20 + $0x50] sm:$0xff]
    %v1976 = vld [vmem:[#allocation20 + $0x58] sm:$0xff]
    %v1977 = vld [vmem:[#allocation20 + $0x60] sm:$0xff]
    %v1978 = vld [vmem:[#allocation20 + $0x68] sm:$0xff]
    %v1979 = vld [vmem:[#allocation20 + $0x70] sm:$0xff]
    %v1980 = vld [vmem:[#allocation20 + $0x78] sm:$0xff]
    %v1981 = vld [vmem:[#allocation20 + $0x80] sm:$0xff]
    %v1982 = vld [vmem:[#allocation20 + $0x88] sm:$0xff]
    %v1983 = vld [vmem:[#allocation20 + $0x90] sm:$0xff]
    %v1984 = vld [vmem:[#allocation20 + $0x98] sm:$0xff]
    %v1986 = vsel %vm273, %v233, 0
    %1988 = vmatprep.subr.mxu0 0.0
    %1989 = vmatpush1.msra.mxu0 %v1969
    %1990 = vmatprep.subr.mxu0 0.0
    %1991 = vmatpush1.msra.mxu0 %v1970
    %1992 = vmatprep.subr.mxu0 0.0
    %1993 = vmatpush1.msra.mxu0 %v1971
    %1994 = vmatprep.subr.mxu0 0.0
    %1995 = vmatpush1.msra.mxu0 %v1972
    %1996 = vmatprep.subr.mxu0 0.0
    %1997 = vmatpush1.msra.mxu0 0.0
    %1998 = vmatprep.subr.mxu0 0.0
    %1999 = vmatpush1.msra.mxu0 0.0
    %2000 = vmatprep.subr.mxu0 0.0
    %2001 = vmatpush1.msra.mxu0 0.0
    %2002 = vmatprep.subr.mxu0 0.0
    %2003 = vmatpush1.msra.mxu0 0.0
    %2004 = vmatprep.subr.mxu0 0.0
    %2005 = vmatpush1.msra.mxu0 0.0
    %2006 = vmatprep.subr.mxu0 0.0
    %2007 = vmatpush1.msra.mxu0 0.0
    %2008 = vmatprep.subr.mxu0 0.0
    %2009 = vmatpush1.msra.mxu0 0.0
    %2010 = vmatprep.subr.mxu0 0.0
    %2011 = vmatpush1.msra.mxu0 0.0
    %2012 = vmatprep.subr.mxu0 0.0
    %2013 = vmatpush1.msra.mxu0 0.0
    %2014 = vmatprep.subr.mxu0 0.0
    %2015 = vmatpush1.msra.mxu0 0.0
    %2016 = vmatprep.subr.mxu0 0.0
    %2017 = vmatpush1.msra.mxu0 0.0
    %2018 = vmatprep.subr.mxu0 0.0
    %2019 = vmatpush1.msra.mxu0 0.0
    %2020 = vmatprep.subr.mxu0 0.0
    %2021 = vmatpush1.msra.mxu0 0.0
    %2022 = vmatprep.subr.mxu0 0.0
    %2023 = vmatpush1.msra.mxu0 0.0
    %2024 = vmatprep.subr.mxu0 0.0
    %2025 = vmatpush1.msra.mxu0 0.0
    %2026 = vmatprep.subr.mxu0 0.0
    %2027 = vmatpush1.msra.mxu0 0.0
    %2028 = vmatprep.subr.mxu0 0.0
    %2029 = vmatpush1.msra.mxu0 0.0
    %2030 = vmatprep.subr.mxu0 0.0
    %2031 = vmatpush1.msra.mxu0 0.0
    %2032 = vmatprep.subr.mxu0 0.0
    %2033 = vmatpush1.msra.mxu0 0.0
    %2034 = vmatprep.subr.mxu0 0.0
    %2035 = vmatpush1.msra.mxu0 0.0
    %2036 = vmatprep.subr.mxu0 0.0
    %2037 = vmatpush1.msra.mxu0 0.0
    %2038 = vmatprep.subr.mxu0 0.0
    %2039 = vmatpush1.msra.mxu0 0.0
    %2040 = vmatprep.subr.mxu0 0.0
    %2041 = vmatpush1.msra.mxu0 0.0
    %2042 = vmatprep.subr.mxu0 0.0
    %2043 = vmatpush1.msra.mxu0 0.0
    %2044 = vmatprep.subr.mxu0 0.0
    %2045 = vmatpush1.msra.mxu0 0.0
    %2046 = vmatprep.subr.mxu0 0.0
    %2047 = vmatpush1.msra.mxu0 0.0
    %2048 = vmatprep.subr.mxu0 0.0
    %2049 = vmatpush1.msra.mxu0 0.0
    %2050 = vmatprep.subr.mxu0 0.0
    %2051 = vmatpush1.msra.mxu0 0.0
    %2052 = vmatprep.mubr.f32.mxu0 0.0
    %2053 = vmatmul.mubr.f32.gmra.mrb[0].mxu0 %v1986
    %v2054 = vpop.f32.mrb[0].mxu0
    %v2055 = vadd.f32 0.0, %v2054
    %v2056 = vpop.f32.mrb[0].mxu0
    %2057 = vdwg.mxu0
    %v2059 = vsel %vm273, %v232, 0
    %2061 = vmatprep.subr.mxu0 0.0
    %2062 = vmatpush1.msra.mxu0 %v1965
    %2063 = vmatprep.subr.mxu0 0.0
    %2064 = vmatpush1.msra.mxu0 %v1966
    %2065 = vmatprep.subr.mxu0 0.0
    %2066 = vmatpush1.msra.mxu0 %v1967
    %2067 = vmatprep.subr.mxu0 0.0
    %2068 = vmatpush1.msra.mxu0 %v1968
    %2069 = vmatprep.subr.mxu0 0.0
    %2070 = vmatpush1.msra.mxu0 0.0
    %2071 = vmatprep.subr.mxu0 0.0
    %2072 = vmatpush1.msra.mxu0 0.0
    %2073 = vmatprep.subr.mxu0 0.0
    %2074 = vmatpush1.msra.mxu0 0.0
    %2075 = vmatprep.subr.mxu0 0.0
    %2076 = vmatpush1.msra.mxu0 0.0
    %2077 = vmatprep.subr.mxu0 0.0
    %2078 = vmatpush1.msra.mxu0 0.0
    %2079 = vmatprep.subr.mxu0 0.0
    %2080 = vmatpush1.msra.mxu0 0.0
    %2081 = vmatprep.subr.mxu0 0.0
    %2082 = vmatpush1.msra.mxu0 0.0
    %2083 = vmatprep.subr.mxu0 0.0
    %2084 = vmatpush1.msra.mxu0 0.0
    %2085 = vmatprep.subr.mxu0 0.0
    %2086 = vmatpush1.msra.mxu0 0.0
    %2087 = vmatprep.subr.mxu0 0.0
    %2088 = vmatpush1.msra.mxu0 0.0
    %2089 = vmatprep.subr.mxu0 0.0
    %2090 = vmatpush1.msra.mxu0 0.0
    %2091 = vmatprep.subr.mxu0 0.0
    %2092 = vmatpush1.msra.mxu0 0.0
    %2093 = vmatprep.subr.mxu0 0.0
    %2094 = vmatpush1.msra.mxu0 0.0
    %2095 = vmatprep.subr.mxu0 0.0
    %2096 = vmatpush1.msra.mxu0 0.0
    %2097 = vmatprep.subr.mxu0 0.0
    %2098 = vmatpush1.msra.mxu0 0.0
    %2099 = vmatprep.subr.mxu0 0.0
    %2100 = vmatpush1.msra.mxu0 0.0
    %2101 = vmatprep.subr.mxu0 0.0
    %2102 = vmatpush1.msra.mxu0 0.0
    %2103 = vmatprep.subr.mxu0 0.0
    %2104 = vmatpush1.msra.mxu0 0.0
    %2105 = vmatprep.subr.mxu0 0.0
    %2106 = vmatpush1.msra.mxu0 0.0
    %2107 = vmatprep.subr.mxu0 0.0
    %2108 = vmatpush1.msra.mxu0 0.0
    %2109 = vmatprep.subr.mxu0 0.0
    %2110 = vmatpush1.msra.mxu0 0.0
    %2111 = vmatprep.subr.mxu0 0.0
    %2112 = vmatpush1.msra.mxu0 0.0
    %2113 = vmatprep.subr.mxu0 0.0
    %2114 = vmatpush1.msra.mxu0 0.0
    %2115 = vmatprep.subr.mxu0 0.0
    %2116 = vmatpush1.msra.mxu0 0.0
    %2117 = vmatprep.subr.mxu0 0.0
    %2118 = vmatpush1.msra.mxu0 0.0
    %2119 = vmatprep.subr.mxu0 0.0
    %2120 = vmatpush1.msra.mxu0 0.0
    %2121 = vmatprep.subr.mxu0 0.0
    %2122 = vmatpush1.msra.mxu0 0.0
    %2123 = vmatprep.subr.mxu0 0.0
    %2124 = vmatpush1.msra.mxu0 0.0
    %2125 = vmatprep.mubr.f32.mxu0 0.0
    %2126 = vmatmul.mubr.f32.gmra.mrb[0].mxu0 %v2059
    %v2127 = vpop.f32.mrb[0].mxu0
    %v2128 = vadd.f32 %v2055, %v2127
    %v2129 = vpop.f32.mrb[0].mxu0
    %2130 = vdwg.mxu0
    %v2132 = vsel %vm273, %v1964, 0
    %2134 = vmatprep.subr.mxu0 0.0
    %2135 = vmatpush1.msra.mxu0 %v1973
    %2136 = vmatprep.subr.mxu0 0.0
    %2137 = vmatpush1.msra.mxu0 %v1974
    %2138 = vmatprep.subr.mxu0 0.0
    %2139 = vmatpush1.msra.mxu0 %v1975
    %2140 = vmatprep.subr.mxu0 0.0
    %2141 = vmatpush1.msra.mxu0 %v1976
    %2142 = vmatprep.subr.mxu0 0.0
    %2143 = vmatpush1.msra.mxu0 0.0
    %2144 = vmatprep.subr.mxu0 0.0
    %2145 = vmatpush1.msra.mxu0 0.0
    %2146 = vmatprep.subr.mxu0 0.0
    %2147 = vmatpush1.msra.mxu0 0.0
    %2148 = vmatprep.subr.mxu0 0.0
    %2149 = vmatpush1.msra.mxu0 0.0
    %2150 = vmatprep.subr.mxu0 0.0
    %2151 = vmatpush1.msra.mxu0 0.0
    %2152 = vmatprep.subr.mxu0 0.0
    %2153 = vmatpush1.msra.mxu0 0.0
    %2154 = vmatprep.subr.mxu0 0.0
    %2155 = vmatpush1.msra.mxu0 0.0
    %2156 = vmatprep.subr.mxu0 0.0
    %2157 = vmatpush1.msra.mxu0 0.0
    %2158 = vmatprep.subr.mxu0 0.0
    %2159 = vmatpush1.msra.mxu0 0.0
    %2160 = vmatprep.subr.mxu0 0.0
    %2161 = vmatpush1.msra.mxu0 0.0
    %2162 = vmatprep.subr.mxu0 0.0
    %2163 = vmatpush1.msra.mxu0 0.0
    %2164 = vmatprep.subr.mxu0 0.0
    %2165 = vmatpush1.msra.mxu0 0.0
    %2166 = vmatprep.subr.mxu0 0.0
    %2167 = vmatpush1.msra.mxu0 0.0
    %2168 = vmatprep.subr.mxu0 0.0
    %2169 = vmatpush1.msra.mxu0 0.0
    %2170 = vmatprep.subr.mxu0 0.0
    %2171 = vmatpush1.msra.mxu0 0.0
    %2172 = vmatprep.subr.mxu0 0.0
    %2173 = vmatpush1.msra.mxu0 0.0
    %2174 = vmatprep.subr.mxu0 0.0
    %2175 = vmatpush1.msra.mxu0 0.0
    %2176 = vmatprep.subr.mxu0 0.0
    %2177 = vmatpush1.msra.mxu0 0.0
    %2178 = vmatprep.subr.mxu0 0.0
    %2179 = vmatpush1.msra.mxu0 0.0
    %2180 = vmatprep.subr.mxu0 0.0
    %2181 = vmatpush1.msra.mxu0 0.0
    %2182 = vmatprep.subr.mxu0 0.0
    %2183 = vmatpush1.msra.mxu0 0.0
    %2184 = vmatprep.subr.mxu0 0.0
    %2185 = vmatpush1.msra.mxu0 0.0
    %2186 = vmatprep.subr.mxu0 0.0
    %2187 = vmatpush1.msra.mxu0 0.0
    %2188 = vmatprep.subr.mxu0 0.0
    %2189 = vmatpush1.msra.mxu0 0.0
    %2190 = vmatprep.subr.mxu0 0.0
    %2191 = vmatpush1.msra.mxu0 0.0
    %2192 = vmatprep.subr.mxu0 0.0
    %2193 = vmatpush1.msra.mxu0 0.0
    %2194 = vmatprep.subr.mxu0 0.0
    %2195 = vmatpush1.msra.mxu0 0.0
    %2196 = vmatprep.subr.mxu0 0.0
    %2197 = vmatpush1.msra.mxu0 0.0
    %2198 = vmatprep.mubr.f32.mxu0 0.0
    %2199 = vmatmul.mubr.f32.gmra.mrb[0].mxu0 %v2132
    %v2200 = vpop.f32.mrb[0].mxu0
    %v2201 = vadd.f32 0.0, %v2200
    %v2202 = vpop.f32.mrb[0].mxu0
    %2203 = vdwg.mxu0
    %v2204 = vadd.f32 %v2128, %v2201
    %v2206 = vsel %vm273, %v1958, 0
    %2208 = vmatprep.subr.mxu0 0.0
    %2209 = vmatpush1.msra.mxu0 %v1977
    %2210 = vmatprep.subr.mxu0 0.0
    %2211 = vmatpush1.msra.mxu0 %v1978
    %2212 = vmatprep.subr.mxu0 0.0
    %2213 = vmatpush1.msra.mxu0 %v1979
    %2214 = vmatprep.subr.mxu0 0.0
    %2215 = vmatpush1.msra.mxu0 %v1980
    %2216 = vmatprep.subr.mxu0 0.0
    %2217 = vmatpush1.msra.mxu0 0.0
    %2218 = vmatprep.subr.mxu0 0.0
    %2219 = vmatpush1.msra.mxu0 0.0
    %2220 = vmatprep.subr.mxu0 0.0
    %2221 = vmatpush1.msra.mxu0 0.0
    %2222 = vmatprep.subr.mxu0 0.0
    %2223 = vmatpush1.msra.mxu0 0.0
    %2224 = vmatprep.subr.mxu0 0.0
    %2225 = vmatpush1.msra.mxu0 0.0
    %2226 = vmatprep.subr.mxu0 0.0
    %2227 = vmatpush1.msra.mxu0 0.0
    %2228 = vmatprep.subr.mxu0 0.0
    %2229 = vmatpush1.msra.mxu0 0.0
    %2230 = vmatprep.subr.mxu0 0.0
    %2231 = vmatpush1.msra.mxu0 0.0
    %2232 = vmatprep.subr.mxu0 0.0
    %2233 = vmatpush1.msra.mxu0 0.0
    %2234 = vmatprep.subr.mxu0 0.0
    %2235 = vmatpush1.msra.mxu0 0.0
    %2236 = vmatprep.subr.mxu0 0.0
    %2237 = vmatpush1.msra.mxu0 0.0
    %2238 = vmatprep.subr.mxu0 0.0
    %2239 = vmatpush1.msra.mxu0 0.0
    %2240 = vmatprep.subr.mxu0 0.0
    %2241 = vmatpush1.msra.mxu0 0.0
    %2242 = vmatprep.subr.mxu0 0.0
    %2243 = vmatpush1.msra.mxu0 0.0
    %2244 = vmatprep.subr.mxu0 0.0
    %2245 = vmatpush1.msra.mxu0 0.0
    %2246 = vmatprep.subr.mxu0 0.0
    %2247 = vmatpush1.msra.mxu0 0.0
    %2248 = vmatprep.subr.mxu0 0.0
    %2249 = vmatpush1.msra.mxu0 0.0
    %2250 = vmatprep.subr.mxu0 0.0
    %2251 = vmatpush1.msra.mxu0 0.0
    %2252 = vmatprep.subr.mxu0 0.0
    %2253 = vmatpush1.msra.mxu0 0.0
    %2254 = vmatprep.subr.mxu0 0.0
    %2255 = vmatpush1.msra.mxu0 0.0
    %2256 = vmatprep.subr.mxu0 0.0
    %2257 = vmatpush1.msra.mxu0 0.0
    %2258 = vmatprep.subr.mxu0 0.0
    %2259 = vmatpush1.msra.mxu0 0.0
    %2260 = vmatprep.subr.mxu0 0.0
    %2261 = vmatpush1.msra.mxu0 0.0
    %2262 = vmatprep.subr.mxu0 0.0
    %2263 = vmatpush1.msra.mxu0 0.0
    %2264 = vmatprep.subr.mxu0 0.0
    %2265 = vmatpush1.msra.mxu0 0.0
    %2266 = vmatprep.subr.mxu0 0.0
    %2267 = vmatpush1.msra.mxu0 0.0
    %2268 = vmatprep.subr.mxu0 0.0
    %2269 = vmatpush1.msra.mxu0 0.0
    %2270 = vmatprep.subr.mxu0 0.0
    %2271 = vmatpush1.msra.mxu0 0.0
    %2272 = vmatprep.mubr.f32.mxu0 0.0
    %2273 = vmatmul.mubr.f32.gmra.mrb[0].mxu0 %v2206
    %v2274 = vpop.f32.mrb[0].mxu0
    %v2275 = vadd.f32 0.0, %v2274
    %v2276 = vpop.f32.mrb[0].mxu0
    %2277 = vdwg.mxu0
    %v2278 = vadd.f32 %v2204, %v2275
    %v2279 = vrot.slane %v1958, 2
    %v2280 = vsel %vm273, %v2279, 0
    %2282 = vmatprep.subr.mxu0 0.0
    %2283 = vmatpush1.msra.mxu0 %v1981
    %2284 = vmatprep.subr.mxu0 0.0
    %2285 = vmatpush1.msra.mxu0 %v1982
    %2286 = vmatprep.subr.mxu0 0.0
    %2287 = vmatpush1.msra.mxu0 %v1983
    %2288 = vmatprep.subr.mxu0 0.0
    %2289 = vmatpush1.msra.mxu0 %v1984
    %2290 = vmatprep.subr.mxu0 0.0
    %2291 = vmatpush1.msra.mxu0 0.0
    %2292 = vmatprep.subr.mxu0 0.0
    %2293 = vmatpush1.msra.mxu0 0.0
    %2294 = vmatprep.subr.mxu0 0.0
    %2295 = vmatpush1.msra.mxu0 0.0
    %2296 = vmatprep.subr.mxu0 0.0
    %2297 = vmatpush1.msra.mxu0 0.0
    %2298 = vmatprep.subr.mxu0 0.0
    %2299 = vmatpush1.msra.mxu0 0.0
    %2300 = vmatprep.subr.mxu0 0.0
    %2301 = vmatpush1.msra.mxu0 0.0
    %2302 = vmatprep.subr.mxu0 0.0
    %2303 = vmatpush1.msra.mxu0 0.0
    %2304 = vmatprep.subr.mxu0 0.0
    %2305 = vmatpush1.msra.mxu0 0.0
    %2306 = vmatprep.subr.mxu0 0.0
    %2307 = vmatpush1.msra.mxu0 0.0
    %2308 = vmatprep.subr.mxu0 0.0
    %2309 = vmatpush1.msra.mxu0 0.0
    %2310 = vmatprep.subr.mxu0 0.0
    %2311 = vmatpush1.msra.mxu0 0.0
    %2312 = vmatprep.subr.mxu0 0.0
    %2313 = vmatpush1.msra.mxu0 0.0
    %2314 = vmatprep.subr.mxu0 0.0
    %2315 = vmatpush1.msra.mxu0 0.0
    %2316 = vmatprep.subr.mxu0 0.0
    %2317 = vmatpush1.msra.mxu0 0.0
    %2318 = vmatprep.subr.mxu0 0.0
    %2319 = vmatpush1.msra.mxu0 0.0
    %2320 = vmatprep.subr.mxu0 0.0
    %2321 = vmatpush1.msra.mxu0 0.0
    %2322 = vmatprep.subr.mxu0 0.0
    %2323 = vmatpush1.msra.mxu0 0.0
    %2324 = vmatprep.subr.mxu0 0.0
    %2325 = vmatpush1.msra.mxu0 0.0
    %2326 = vmatprep.subr.mxu0 0.0
    %2327 = vmatpush1.msra.mxu0 0.0
    %2328 = vmatprep.subr.mxu0 0.0
    %2329 = vmatpush1.msra.mxu0 0.0
    %2330 = vmatprep.subr.mxu0 0.0
    %2331 = vmatpush1.msra.mxu0 0.0
    %2332 = vmatprep.subr.mxu0 0.0
    %2333 = vmatpush1.msra.mxu0 0.0
    %2334 = vmatprep.subr.mxu0 0.0
    %2335 = vmatpush1.msra.mxu0 0.0
    %2336 = vmatprep.subr.mxu0 0.0
    %2337 = vmatpush1.msra.mxu0 0.0
    %2338 = vmatprep.subr.mxu0 0.0
    %2339 = vmatpush1.msra.mxu0 0.0
    %2340 = vmatprep.subr.mxu0 0.0
    %2341 = vmatpush1.msra.mxu0 0.0
    %2342 = vmatprep.subr.mxu0 0.0
    %2343 = vmatpush1.msra.mxu0 0.0
    %2344 = vmatprep.subr.mxu0 0.0
    %2345 = vmatpush1.msra.mxu0 0.0
    %2346 = vmatprep.mubr.f32.mxu0 0.0
    %2347 = vmatmul.mubr.f32.gmra.mrb[0].mxu0 %v2280
    %v2348 = vpop.f32.mrb[0].mxu0
    %v2349 = vadd.f32 0.0, %v2348
    %v2350 = vpop.f32.mrb[0].mxu0
    %2351 = vdwg.mxu0
    %v2352 = vadd.f32 %v2278, %v2349
    %v2353 = vld [vmem:[#allocation21] sm:$0x1]
    %v2355 = vlaneseq
    %v2356 = vshrl.u32 %v2355, 7
    %v2357 = vsub.s32 0, %v2356
    %v2358 = vrot.slane %v2353, %v2357
    %v2360 = vadd.f32 %v2352, %v2358
    %vm2361 = vcmask 9216
    %2362 = vst.msk [vmem:[#allocation23] sm:$0x3] %vm2361, %v2360
    // Predicated region
    $region98: #{tpu_custom_call.1} parent=1 // pred_check
      _
    $region99: #{tpu_custom_call.1} parent=1 // pred_check_branch
      %2364 = sbr.rel (0) target = $region101
    $region100: #{tpu_custom_call.1} parent=1 // pred_region
      %s2366 = ssub.s32 32, 32
      %2367 = vsyncadd [#allocation5], %s2366
      %s2369 = sshll.u32 [#allocation23], 4
      %s2370 = int_to_ptr.vmem [resolvable:$true] %s2369
      %2372 = dma.vmem_to_hbm [thread:$0]  %s2370, 32, %s12, [#allocation5]
    $region101: #{tpu_custom_call.1} parent=1 // pred_fallthru
      _
    // Predicated region
    $region102: #{tpu_custom_call.1} parent=1 // pred_check
      _
    $region103: #{tpu_custom_call.1} parent=1 // pred_check_branch
      %2374 = sbr.rel (0) target = $region105
    $region104: #{tpu_custom_call.1} parent=1 // pred_region
      %2375 = dma.done [#allocation5], 32
    $region105: #{tpu_custom_call.1} parent=1 // pred_fallthru
      _
    %2376 = vsyncpa [#allocation4], 1
    %2377 = vsyncpa [#allocation7], 1
    %2378 = vsyncpa [#allocation10], 1
    %2379 = vsyncpa [#allocation13], 1
    %2380 = vsyncpa [#allocation16], 1
    %2381 = vsyncpa [#allocation19], 1
    %2382 = vsyncpa [#allocation22], 1
    %2383 = vsyncpa [#allocation5], 1

</llo_original>
